<compile_context>
chip_gen: v7x
topology: tpu7x:2x2x1
jax: 0.10.0
libtpu: 0.0.40
codegen_flags: <defaults>
</compile_context>

<pallas_src>
import functools
import math

import jax
import jax.numpy as jnp
from jax.experimental import pallas as pl
from jax.experimental.pallas import tpu as pltpu


# ----------------------------------------------------------------------------
# VMEM budget (generation aware)
# ----------------------------------------------------------------------------
def _vmem_capacity_bytes():
    cap = 128 * 1024 * 1024          # v5e / v6e default
    try:
        info = pltpu.get_tpu_info()
        cap = int(getattr(info, "vmem_capacity_bytes", cap)) or cap
    except Exception:
        pass
    return cap


# ----------------------------------------------------------------------------
# Tile selection (budget driven): prefer full channels, shrink H first.
# ----------------------------------------------------------------------------
def _divisors_desc(x):
    return [dv for dv in range(x, 0, -1) if x % dv == 0]


def _channel_tiles_desc(c):
    """Full dim first, then descending 128-multiples that divide c."""
    cands = [c]
    t = (c // 128) * 128
    while t >= 128:
        if t != c and c % t == 0:
            cands.append(t)
        t -= 128
    return cands


def _pick_tiles(*, wp, cin, cp, ho, wo, k, d, s, eff,
                x_bytes, dw_bytes, pw_bytes, out_bytes, budget,
                h_tile=None, cin_tile=None, cout_tile=None):
    ho_cands = _divisors_desc(ho)
    if h_tile is not None:
        ho_cands = [dv for dv in ho_cands if dv <= h_tile] or [1]
    tci_cands = [cin_tile] if cin_tile is not None else _channel_tiles_desc(cin)
    tco_cands = [cout_tile] if cout_tile is not None else _channel_tiles_desc(cp)

    def cost(ho_t, tci, tco):
        h_in = (ho_t - 1) * s + eff
        n_ci = cin // tci
        xb = h_in * wp * tci * x_bytes          # input block
        dwb = k * k * tci * dw_bytes            # depthwise weights block
        pwb = tci * tco * pw_bytes              # pointwise weights block
        ob = ho_t * wo * tco * out_bytes        # output block
        acc = ho_t * wo * tco * 4 if n_ci > 1 else 0
        return 2 * (xb + dwb + pwb + ob) + acc  # double-buffered in/out

    # Preference order: full Cout > full Cin > large H tile.
    for tco in tco_cands:
        for tci in tci_cands:
            for ho_t in ho_cands:
                if cost(ho_t, tci, tco) <= budget:
                    return ho_t, tci, tco
    return ho_cands[-1], tci_cands[-1], tco_cands[-1]


# ----------------------------------------------------------------------------
# Fused depthwise(kxk, dilation d, stride s) + pointwise(1x1) kernel body.
#   grid = (N, H_tiles, Cout_tiles, Cin_tiles); Cin is the LAST (reduction)
#   axis and the output index_map ignores it, so the output block (or the f32
#   acc scratch when n_ci > 1) stays resident across the reduction.
# ----------------------------------------------------------------------------
def _sepconv_kernel(x_ref, dw_ref, pw_ref, o_ref, *scratch, k, d, s, n_ci):
    acc_ref = scratch[0] if scratch else None
    ho_t, wo, tco = o_ref.shape
    tci = x_ref.shape[-1]
    dw_dtype = dw_ref.dtype

    # ---- depthwise kxk (dilation d, stride s folded into the taps) ----
    dw_acc = jnp.zeros((ho_t, wo, tci), dw_dtype)
    for kh in range(k):
        rows = pl.ds(kh * d, ho_t) if s == 1 else pl.ds(kh * d, ho_t, stride=s)
        for kw in range(k):
            cols = pl.ds(kw * d, wo) if s == 1 else pl.ds(kw * d, wo, stride=s)
            patch = x_ref[rows, cols, :].astype(dw_dtype)
            wtap = dw_ref[kh * k + kw, :].reshape(1, 1, tci)
            dw_acc = dw_acc + patch * wtap

    # ---- pointwise 1x1 on the MXU (f32 accumulation) ----
    # TODO(synk): when wo % 8 != 0 this reshape re-tiles vregs; pad W lane-dense.
    lhs = dw_acc.reshape(ho_t * wo, tci).astype(pw_ref.dtype)
    contrib = jnp.dot(lhs, pw_ref[...], preferred_element_type=jnp.float32)

    if n_ci == 1:
        # Single reduction step: write straight into the resident output block.
        o_ref[...] = contrib.reshape(ho_t, wo, tco).astype(o_ref.dtype)
    else:
        ci = pl.program_id(3)

        @pl.when(ci == 0)
        def _init():
            acc_ref[...] = jnp.zeros_like(acc_ref)

        acc_ref[...] += contrib

        @pl.when(ci == n_ci - 1)
        def _store():
            o_ref[...] = acc_ref[...].reshape(ho_t, wo, tco).astype(o_ref.dtype)


def _sep_conv_pallas(xt, dw, pw, *, k, d, s, ho, wo, ho_t, tci, tco,
                     out_dtype, vmem_limit):
    n, n_h, h_in, wp, cin = xt.shape
    cp = pw.shape[1]
    n_ci = cin // tci
    n_co = cp // tco

    kern = functools.partial(_sepconv_kernel, k=k, d=d, s=s, n_ci=n_ci)
    scratch = [] if n_ci == 1 else [pltpu.VMEM((ho_t * wo, tco), jnp.float32)]

    return pl.pallas_call(
        kern,
        out_shape=jax.ShapeDtypeStruct((n, ho, wo, cp), out_dtype),
        grid_spec=pltpu.PrefetchScalarGridSpec(
            num_scalar_prefetch=0,
            grid=(n, n_h, n_co, n_ci),
            in_specs=[
                # overlapping (halo) H row-tiles, channel-tiled on the lane axis
                pl.BlockSpec((None, None, h_in, wp, tci),
                             lambda b, ht, co, ci: (b, ht, 0, 0, ci)),
                pl.BlockSpec((k * k, tci), lambda b, ht, co, ci: (0, ci)),
                pl.BlockSpec((tci, tco), lambda b, ht, co, ci: (ci, co)),
            ],
            out_specs=pl.BlockSpec((None, ho_t, wo, tco),
                                   lambda b, ht, co, ci: (b, ht, 0, co)),
            scratch_shapes=scratch,
        ),
        compiler_params=pltpu.CompilerParams(
            dimension_semantics=("parallel", "parallel", "parallel",
                                 "arbitrary"),
            vmem_limit_bytes=vmem_limit),
    )(xt, dw, pw)


# ----------------------------------------------------------------------------
# Public module: SeparableConv2d_same.forward  (NCHW in / NCHW out, torch
# weight layouts: depthwise (Cin,1,k,k), pointwise (Cout,Cin,1,1), no bias).
# ----------------------------------------------------------------------------
@functools.partial(
    jax.jit,
    static_argnames=("kernel_size", "stride", "dilation", "x_dtype",
                     "depthwise_dtype", "mxu_dtype", "out_dtype",
                     "h_tile", "cin_tile", "cout_tile"))
def separable_conv2d_same(x_nchw, dw_weight, pw_weight, *, kernel_size=3,
                          stride=1, dilation=1,
                          x_dtype=jnp.bfloat16,        # kernel input dtype
                          depthwise_dtype=jnp.float32, # depthwise MAC dtype
                          mxu_dtype=jnp.bfloat16,      # pointwise MXU dtype
                          out_dtype=jnp.float32,
                          h_tile=None, cin_tile=None, cout_tile=None):
    n, cin, h, w = x_nchw.shape
    k, d, s = kernel_size, dilation, stride
    cout = pw_weight.shape[0]

    # fixed_padding (identical to the PyTorch helper)
    eff = k + (k - 1) * (d - 1)
    tot = eff - 1
    beg, end = tot // 2, tot - tot // 2

    # NCHW -> NHWC (channels on the lane axis), narrow to x_dtype
    xx = jnp.transpose(x_nchw, (0, 2, 3, 1)).astype(x_dtype)
    xp = jnp.pad(xx, ((0, 0), (beg, end), (beg, end), (0, 0)))

    hp, wp = h + tot, w + tot
    ho = (hp - eff) // s + 1
    wo = (wp - eff) // s + 1

    # Pad Cout to a lane-dense multiple of 128 (unmasked vst stores).
    cp = ((cout + 127) // 128) * 128

    cap = _vmem_capacity_bytes()
    ho_t, tci, tco = _pick_tiles(
        wp=wp, cin=cin, cp=cp, ho=ho, wo=wo, k=k, d=d, s=s, eff=eff,
        x_bytes=jnp.dtype(x_dtype).itemsize,
        dw_bytes=jnp.dtype(depthwise_dtype).itemsize,
        pw_bytes=jnp.dtype(mxu_dtype).itemsize,
        out_bytes=jnp.dtype(out_dtype).itemsize,
        budget=int(cap * 0.6),
        h_tile=h_tile, cin_tile=cin_tile, cout_tile=cout_tile)
    n_h = ho // ho_t
    h_in = (ho_t - 1) * s + eff

    # Overlapping H row-tiles with an (eff - s) halo, materialized wrapper-side.
    if n_h == 1:
        xt = xp[:, None, :h_in]
    else:
        xt = jnp.stack(
            [jax.lax.dynamic_slice_in_dim(xp, t * ho_t * s, h_in, axis=1)
             for t in range(n_h)], axis=1)

    # torch weight layouts -> kernel layouts
    dw = jnp.transpose(dw_weight.reshape(cin, k * k), (1, 0)).astype(
        depthwise_dtype)
    pw = jnp.transpose(pw_weight.reshape(cout, cin), (1, 0)).astype(mxu_dtype)
    if cp != cout:
        pw = jnp.pad(pw, ((0, 0), (0, cp - cout)))

    y = _sep_conv_pallas(xt, dw, pw, k=k, d=d, s=s, ho=ho, wo=wo, ho_t=ho_t,
                         tci=tci, tco=tco, out_dtype=out_dtype,
                         vmem_limit=int(cap * 0.75))
    return jnp.transpose(y[..., :cout], (0, 3, 1, 2))   # NHWC -> NCHW


# ----------------------------------------------------------------------------
# Plain-JAX reference (for in-script correctness check)
# ----------------------------------------------------------------------------
def separable_conv2d_same_reference(x, dw_weight, pw_weight, *, kernel_size=3,
                                    stride=1, dilation=1):
    k, d, s = kernel_size, dilation, stride
    cin = x.shape[1]
    eff = k + (k - 1) * (d - 1)
    tot = eff - 1
    beg, end = tot // 2, tot - tot // 2
    xp = jnp.pad(x, ((0, 0), (0, 0), (beg, end), (beg, end)))
    y = jax.lax.conv_general_dilated(
        xp, dw_weight, window_strides=(s, s), padding='VALID',
        rhs_dilation=(d, d), feature_group_count=cin,
        dimension_numbers=('NCHW', 'OIHW', 'NCHW'),
        precision=jax.lax.Precision.HIGHEST)
    y = jax.lax.conv_general_dilated(
        y, pw_weight, window_strides=(1, 1), padding='VALID',
        dimension_numbers=('NCHW', 'OIHW', 'NCHW'),
        precision=jax.lax.Precision.HIGHEST)
    return y


# ----------------------------------------------------------------------------
if __name__ == "__main__":
    key = jax.random.PRNGKey(0)

    def make_weights(wkey, cin, cout, k):
        k1, k2 = jax.random.split(wkey)
        dw = jax.random.normal(k1, (cin, 1, k, k), jnp.float32) * math.sqrt(
            2.0 / (cin * k * k))
        pw = jax.random.normal(k2, (cout, cin, 1, 1), jnp.float32) * math.sqrt(
            2.0 / cout)
        return dw, pw

    # (n, cin, cout, H, W, stride, dilation, extra-kwargs, tolerance)
    configs = [
        # plain sep-conv, cout padded 64 -> 128 lanes
        (2, 32, 64, 16, 16, 1, 1, {}, 3e-2),
        # stride-2 (entry-flow style), strided taps
        (2, 32, 64, 16, 16, 2, 1, {}, 3e-2),
        # dilated, full-channel tiles, all-f32 "verification" path
        (1, 384, 640, 16, 16, 1, 2,
         dict(x_dtype=jnp.float32, mxu_dtype=jnp.float32), 5e-3),
        # H row-tiling with halo + bf16 depthwise MAC (v6e/v7x path)
        (1, 48, 96, 32, 32, 1, 1,
         dict(h_tile=8, depthwise_dtype=jnp.bfloat16), 5e-2),
        # multi-step Cin reduction (f32 accumulator scratch path)
        (1, 256, 128, 16, 16, 1, 1, dict(cin_tile=128), 3e-2),
        # multiple Cout tiles
        (1, 128, 256, 16, 16, 1, 1, dict(cout_tile=128), 3e-2),
    ]
    for i, (n, cin, cout, h, w, s, d, kw, tol) in enumerate(configs):
        key, kx, kwkey = jax.random.split(key, 3)
        x = jax.random.normal(kx, (n, cin, h, w), jnp.float32)
        dw_w, pw_w = make_weights(kwkey, cin, cout, 3)

        out = separable_conv2d_same(x, dw_w, pw_w, kernel_size=3, stride=s,
                                    dilation=d, **kw)
        ref = separable_conv2d_same_reference(x, dw_w, pw_w, kernel_size=3,
                                              stride=s, dilation=d)
        out, ref = jax.block_until_ready((out, ref))

        assert out.shape == ref.shape, (i, out.shape, ref.shape)
        err = float(jnp.max(jnp.abs(out - ref)) /
                    (jnp.max(jnp.abs(ref)) + 1e-6))
        assert err < tol, f"config {i}: relative max error {err:.4e}"

    print("KERNEL_OK")
</pallas_src>

<mosaic_0001>
module attributes {stable_mosaic.version = 11 : i64} {
  func.func @_sepconv_kernel(%arg0: i32, %arg1: i32, %arg2: i32, %arg3: i32, %arg4: memref<1x1x18x18x32xbf16, #tpu.memory_space<vmem>>, %arg5: memref<9x32xf32, #tpu.memory_space<vmem>>, %arg6: memref<32x128xbf16, #tpu.memory_space<vmem>>, %arg7: memref<1x16x16x128xf32, #tpu.memory_space<vmem>>) attributes {dimension_semantics = [#tpu.dimension_semantics<parallel>, #tpu.dimension_semantics<parallel>, #tpu.dimension_semantics<parallel>, #tpu.dimension_semantics<arbitrary>], iteration_bounds = array<i64: 2, 1, 1, 1>, scalar_prefetch = 0 : i64, scratch_operands = 0 : i64, tpu.core_type = #tpu.core_type<tc>, window_params = [{transform_indices = @transform_0, window_bounds = array<i64: 1, 1, 18, 18, 32>}, {transform_indices = @transform_1, window_bounds = array<i64: 9, 32>}, {transform_indices = @transform_2, window_bounds = array<i64: 32, 128>}, {transform_indices = @transform_3, window_bounds = array<i64: 1, 16, 16, 128>}]} {
    %cst = arith.constant 0.000000e+00 : f32
    %0 = vector.broadcast %cst : f32 to vector<16x16x32xf32>
    %c0 = arith.constant 0 : index
    %c0_0 = arith.constant 0 : index
    %c0_1 = arith.constant 0 : index
    %c0_2 = arith.constant 0 : index
    %c0_3 = arith.constant 0 : index
    %1 = vector.load %arg4[%c0, %c0_0, %c0_1, %c0_2, %c0_3] : memref<1x1x18x18x32xbf16, #tpu.memory_space<vmem>>, vector<1x1x16x16x32xbf16>
    %2 = vector.shape_cast %1 : vector<1x1x16x16x32xbf16> to vector<16x16x32xbf16>
    %3 = arith.extf %2 : vector<16x16x32xbf16> to vector<16x16x32xf32>
    %c0_4 = arith.constant 0 : index
    %c0_5 = arith.constant 0 : index
    %4 = vector.load %arg5[%c0_4, %c0_5] : memref<9x32xf32, #tpu.memory_space<vmem>>, vector<1x32xf32>
    %5 = vector.shape_cast %4 : vector<1x32xf32> to vector<32xf32>
    %6 = vector.shape_cast %5 : vector<32xf32> to vector<1x1x32xf32>
    %7 = vector.broadcast %6 : vector<1x1x32xf32> to vector<16x16x32xf32>
    %8 = arith.mulf %3, %7 : vector<16x16x32xf32>
    %9 = arith.addf %0, %8 : vector<16x16x32xf32>
    %c0_6 = arith.constant 0 : index
    %c0_7 = arith.constant 0 : index
    %c0_8 = arith.constant 0 : index
    %c1 = arith.constant 1 : index
    %c0_9 = arith.constant 0 : index
    %10 = vector.load %arg4[%c0_6, %c0_7, %c0_8, %c1, %c0_9] : memref<1x1x18x18x32xbf16, #tpu.memory_space<vmem>>, vector<1x1x16x16x32xbf16>
    %11 = vector.shape_cast %10 : vector<1x1x16x16x32xbf16> to vector<16x16x32xbf16>
    %12 = arith.extf %11 : vector<16x16x32xbf16> to vector<16x16x32xf32>
    %c1_10 = arith.constant 1 : index
    %c0_11 = arith.constant 0 : index
    %13 = vector.load %arg5[%c1_10, %c0_11] : memref<9x32xf32, #tpu.memory_space<vmem>>, vector<1x32xf32>
    %14 = vector.shape_cast %13 : vector<1x32xf32> to vector<32xf32>
    %15 = vector.shape_cast %14 : vector<32xf32> to vector<1x1x32xf32>
    %16 = vector.broadcast %15 : vector<1x1x32xf32> to vector<16x16x32xf32>
    %17 = arith.mulf %12, %16 : vector<16x16x32xf32>
    %18 = arith.addf %9, %17 : vector<16x16x32xf32>
    %c0_12 = arith.constant 0 : index
    %c0_13 = arith.constant 0 : index
    %c0_14 = arith.constant 0 : index
    %c2 = arith.constant 2 : index
    %c0_15 = arith.constant 0 : index
    %19 = vector.load %arg4[%c0_12, %c0_13, %c0_14, %c2, %c0_15] : memref<1x1x18x18x32xbf16, #tpu.memory_space<vmem>>, vector<1x1x16x16x32xbf16>
    %20 = vector.shape_cast %19 : vector<1x1x16x16x32xbf16> to vector<16x16x32xbf16>
    %21 = arith.extf %20 : vector<16x16x32xbf16> to vector<16x16x32xf32>
    %c2_16 = arith.constant 2 : index
    %c0_17 = arith.constant 0 : index
    %22 = vector.load %arg5[%c2_16, %c0_17] : memref<9x32xf32, #tpu.memory_space<vmem>>, vector<1x32xf32>
    %23 = vector.shape_cast %22 : vector<1x32xf32> to vector<32xf32>
    %24 = vector.shape_cast %23 : vector<32xf32> to vector<1x1x32xf32>
    %25 = vector.broadcast %24 : vector<1x1x32xf32> to vector<16x16x32xf32>
    %26 = arith.mulf %21, %25 : vector<16x16x32xf32>
    %27 = arith.addf %18, %26 : vector<16x16x32xf32>
    %c0_18 = arith.constant 0 : index
    %c0_19 = arith.constant 0 : index
    %c1_20 = arith.constant 1 : index
    %c0_21 = arith.constant 0 : index
    %c0_22 = arith.constant 0 : index
    %28 = vector.load %arg4[%c0_18, %c0_19, %c1_20, %c0_21, %c0_22] : memref<1x1x18x18x32xbf16, #tpu.memory_space<vmem>>, vector<1x1x16x16x32xbf16>
    %29 = vector.shape_cast %28 : vector<1x1x16x16x32xbf16> to vector<16x16x32xbf16>
    %30 = arith.extf %29 : vector<16x16x32xbf16> to vector<16x16x32xf32>
    %c3 = arith.constant 3 : index
    %c0_23 = arith.constant 0 : index
    %31 = vector.load %arg5[%c3, %c0_23] : memref<9x32xf32, #tpu.memory_space<vmem>>, vector<1x32xf32>
    %32 = vector.shape_cast %31 : vector<1x32xf32> to vector<32xf32>
    %33 = vector.shape_cast %32 : vector<32xf32> to vector<1x1x32xf32>
    %34 = vector.broadcast %33 : vector<1x1x32xf32> to vector<16x16x32xf32>
    %35 = arith.mulf %30, %34 : vector<16x16x32xf32>
    %36 = arith.addf %27, %35 : vector<16x16x32xf32>
    %c0_24 = arith.constant 0 : index
    %c0_25 = arith.constant 0 : index
    %c1_26 = arith.constant 1 : index
    %c1_27 = arith.constant 1 : index
    %c0_28 = arith.constant 0 : index
    %37 = vector.load %arg4[%c0_24, %c0_25, %c1_26, %c1_27, %c0_28] : memref<1x1x18x18x32xbf16, #tpu.memory_space<vmem>>, vector<1x1x16x16x32xbf16>
    %38 = vector.shape_cast %37 : vector<1x1x16x16x32xbf16> to vector<16x16x32xbf16>
    %39 = arith.extf %38 : vector<16x16x32xbf16> to vector<16x16x32xf32>
    %c4 = arith.constant 4 : index
    %c0_29 = arith.constant 0 : index
    %40 = vector.load %arg5[%c4, %c0_29] : memref<9x32xf32, #tpu.memory_space<vmem>>, vector<1x32xf32>
    %41 = vector.shape_cast %40 : vector<1x32xf32> to vector<32xf32>
    %42 = vector.shape_cast %41 : vector<32xf32> to vector<1x1x32xf32>
    %43 = vector.broadcast %42 : vector<1x1x32xf32> to vector<16x16x32xf32>
    %44 = arith.mulf %39, %43 : vector<16x16x32xf32>
    %45 = arith.addf %36, %44 : vector<16x16x32xf32>
    %c0_30 = arith.constant 0 : index
    %c0_31 = arith.constant 0 : index
    %c1_32 = arith.constant 1 : index
    %c2_33 = arith.constant 2 : index
    %c0_34 = arith.constant 0 : index
    %46 = vector.load %arg4[%c0_30, %c0_31, %c1_32, %c2_33, %c0_34] : memref<1x1x18x18x32xbf16, #tpu.memory_space<vmem>>, vector<1x1x16x16x32xbf16>
    %47 = vector.shape_cast %46 : vector<1x1x16x16x32xbf16> to vector<16x16x32xbf16>
    %48 = arith.extf %47 : vector<16x16x32xbf16> to vector<16x16x32xf32>
    %c5 = arith.constant 5 : index
    %c0_35 = arith.constant 0 : index
    %49 = vector.load %arg5[%c5, %c0_35] : memref<9x32xf32, #tpu.memory_space<vmem>>, vector<1x32xf32>
    %50 = vector.shape_cast %49 : vector<1x32xf32> to vector<32xf32>
    %51 = vector.shape_cast %50 : vector<32xf32> to vector<1x1x32xf32>
    %52 = vector.broadcast %51 : vector<1x1x32xf32> to vector<16x16x32xf32>
    %53 = arith.mulf %48, %52 : vector<16x16x32xf32>
    %54 = arith.addf %45, %53 : vector<16x16x32xf32>
    %c0_36 = arith.constant 0 : index
    %c0_37 = arith.constant 0 : index
    %c2_38 = arith.constant 2 : index
    %c0_39 = arith.constant 0 : index
    %c0_40 = arith.constant 0 : index
    %55 = vector.load %arg4[%c0_36, %c0_37, %c2_38, %c0_39, %c0_40] : memref<1x1x18x18x32xbf16, #tpu.memory_space<vmem>>, vector<1x1x16x16x32xbf16>
    %56 = vector.shape_cast %55 : vector<1x1x16x16x32xbf16> to vector<16x16x32xbf16>
    %57 = arith.extf %56 : vector<16x16x32xbf16> to vector<16x16x32xf32>
    %c6 = arith.constant 6 : index
    %c0_41 = arith.constant 0 : index
    %58 = vector.load %arg5[%c6, %c0_41] : memref<9x32xf32, #tpu.memory_space<vmem>>, vector<1x32xf32>
    %59 = vector.shape_cast %58 : vector<1x32xf32> to vector<32xf32>
    %60 = vector.shape_cast %59 : vector<32xf32> to vector<1x1x32xf32>
    %61 = vector.broadcast %60 : vector<1x1x32xf32> to vector<16x16x32xf32>
    %62 = arith.mulf %57, %61 : vector<16x16x32xf32>
    %63 = arith.addf %54, %62 : vector<16x16x32xf32>
    %c0_42 = arith.constant 0 : index
    %c0_43 = arith.constant 0 : index
    %c2_44 = arith.constant 2 : index
    %c1_45 = arith.constant 1 : index
    %c0_46 = arith.constant 0 : index
    %64 = vector.load %arg4[%c0_42, %c0_43, %c2_44, %c1_45, %c0_46] : memref<1x1x18x18x32xbf16, #tpu.memory_space<vmem>>, vector<1x1x16x16x32xbf16>
    %65 = vector.shape_cast %64 : vector<1x1x16x16x32xbf16> to vector<16x16x32xbf16>
    %66 = arith.extf %65 : vector<16x16x32xbf16> to vector<16x16x32xf32>
    %c7 = arith.constant 7 : index
    %c0_47 = arith.constant 0 : index
    %67 = vector.load %arg5[%c7, %c0_47] : memref<9x32xf32, #tpu.memory_space<vmem>>, vector<1x32xf32>
    %68 = vector.shape_cast %67 : vector<1x32xf32> to vector<32xf32>
    %69 = vector.shape_cast %68 : vector<32xf32> to vector<1x1x32xf32>
    %70 = vector.broadcast %69 : vector<1x1x32xf32> to vector<16x16x32xf32>
    %71 = arith.mulf %66, %70 : vector<16x16x32xf32>
    %72 = arith.addf %63, %71 : vector<16x16x32xf32>
    %c0_48 = arith.constant 0 : index
    %c0_49 = arith.constant 0 : index
    %c2_50 = arith.constant 2 : index
    %c2_51 = arith.constant 2 : index
    %c0_52 = arith.constant 0 : index
    %73 = vector.load %arg4[%c0_48, %c0_49, %c2_50, %c2_51, %c0_52] : memref<1x1x18x18x32xbf16, #tpu.memory_space<vmem>>, vector<1x1x16x16x32xbf16>
    %74 = vector.shape_cast %73 : vector<1x1x16x16x32xbf16> to vector<16x16x32xbf16>
    %75 = arith.extf %74 : vector<16x16x32xbf16> to vector<16x16x32xf32>
    %c8 = arith.constant 8 : index
    %c0_53 = arith.constant 0 : index
    %76 = vector.load %arg5[%c8, %c0_53] : memref<9x32xf32, #tpu.memory_space<vmem>>, vector<1x32xf32>
    %77 = vector.shape_cast %76 : vector<1x32xf32> to vector<32xf32>
    %78 = vector.shape_cast %77 : vector<32xf32> to vector<1x1x32xf32>
    %79 = vector.broadcast %78 : vector<1x1x32xf32> to vector<16x16x32xf32>
    %80 = arith.mulf %75, %79 : vector<16x16x32xf32>
    %81 = arith.addf %72, %80 : vector<16x16x32xf32>
    %82 = vector.shape_cast %81 : vector<16x16x32xf32> to vector<256x32xf32>
    %83 = arith.truncf %82 : vector<256x32xf32> to vector<256x32xbf16>
    %c0_54 = arith.constant 0 : index
    %c0_55 = arith.constant 0 : index
    %84 = vector.load %arg6[%c0_54, %c0_55] : memref<32x128xbf16, #tpu.memory_space<vmem>>, vector<32x128xbf16>
    %cst_56 = arith.constant dense<0.000000e+00> : vector<256x128xf32>
    %85 = tpu.matmul %83, %84, %cst_56 {dimension_numbers = #tpu.dot_dimension_numbers<[1], [0], [0], [1], [0, 0, 1, 1], [], []>} : vector<256x32xbf16>, vector<32x128xbf16>, vector<256x128xf32> -> vector<256x128xf32>
    %86 = vector.shape_cast %85 : vector<256x128xf32> to vector<16x16x128xf32>
    %c0_57 = arith.constant 0 : index
    %c0_58 = arith.constant 0 : index
    %c0_59 = arith.constant 0 : index
    %c0_60 = arith.constant 0 : index
    %87 = vector.load %arg7[%c0_57, %c0_58, %c0_59, %c0_60] : memref<1x16x16x128xf32, #tpu.memory_space<vmem>>, vector<1x16x16x128xf32>
    %88 = vector.shape_cast %87 : vector<1x16x16x128xf32> to vector<16x16x128xf32>
    %89 = vector.shape_cast %86 : vector<16x16x128xf32> to vector<1x16x16x128xf32>
    tpu.vector_store %arg7[%c0_57, %c0_58, %c0_59, %c0_60], %89 {strides = array<i32>} : memref<1x16x16x128xf32, #tpu.memory_space<vmem>>, vector<1x16x16x128xf32>,
    return
  }
  func.func @transform_0(%arg0: i32, %arg1: i32, %arg2: i32, %arg3: i32) -> (i32, i32, i32, i32, i32) {
    %c0_i32 = arith.constant 0 : i32
    %c0_i32_0 = arith.constant 0 : i32
    %c0_i32_1 = arith.constant 0 : i32
    return %arg0, %arg1, %c0_i32, %c0_i32_0, %arg3 : i32, i32, i32, i32, i32
  }
  func.func @transform_1(%arg0: i32, %arg1: i32, %arg2: i32, %arg3: i32) -> (i32, i32) {
    %c0_i32 = arith.constant 0 : i32
    %c0_i32_0 = arith.constant 0 : i32
    return %c0_i32, %arg3 : i32, i32
  }
  func.func @transform_2(%arg0: i32, %arg1: i32, %arg2: i32, %arg3: i32) -> (i32, i32) {
    %c0_i32 = arith.constant 0 : i32
    return %arg3, %arg2 : i32, i32
  }
  func.func @transform_3(%arg0: i32, %arg1: i32, %arg2: i32, %arg3: i32) -> (i32, i32, i32, i32) {
    %c0_i32 = arith.constant 0 : i32
    %c0_i32_0 = arith.constant 0 : i32
    return %arg0, %arg1, %c0_i32, %arg2 : i32, i32, i32, i32
  }
}

</mosaic_0001>

<llo_original>
// kernel: separable_conv2d_same.1
$region0: #{separable_conv2d_same.1}
  #allocation0 [shape = 'u32[]', space=smem, size = 0x4, offset = 0x4, fixed_abs, tag = 'smem constant byte address 0x4 - core index']
  #allocation1 [shape = 'u32[144,128]{1,0:T(1,128)}', space=vmem, size = 0x12000, scoped, tag = 'internal scratch']
  %s0 = inlined_call_operand.hbm [shape: bf16[2,1,18,18,32], index: 0, kind: input, shape index: {}]
  %s1 = inlined_call_operand.hbm [shape: f32[9,32], index: 1, kind: input, shape index: {}]
  %s2 = inlined_call_operand.hbm [shape: bf16[32,128], index: 2, kind: input, shape index: {}]
  %s3 = inlined_call_operand.hbm [shape: f32[2,16,16,128], index: 3, kind: output, shape index: {}]
  %s4 = sld [smem:[#allocation0]]
  $region57: #{separable_conv2d_same.1} parent=0
    _
  %s6 = ssub.s32 1, %s4
  %s7 = scalar_select 0, %s6, %s4
  $region1: #{separable_conv2d_same.1} parent=0
    #allocation2 [shape = 'u8[221184]{0}', space=vmem, size = 0x36000, scoped, tag = 'input window, operand 0']
    #allocation3 [shape = 's32[2]{0}', space=sflag, size = 0x8, scoped, tag = 'scoped memory for separable_conv2d_same.1']
    #allocation4 [shape = 's32[2]{0}', space=sflag, size = 0x8, scoped, tag = 'scoped memory for separable_conv2d_same.1']
    #allocation5 [shape = 'u8[8192]{0}', space=vmem, size = 0x2000, scoped, tag = 'input window, operand 1, single buffered']
    #allocation6 [shape = 's32[1]{0}', space=sflag, size = 0x4, scoped, tag = 'scoped memory for separable_conv2d_same.1']
    #allocation7 [shape = 'u8[8192]{0}', space=vmem, size = 0x2000, scoped, tag = 'input window, operand 2, single buffered']
    #allocation8 [shape = 'u8[262144]{0}', space=vmem, size = 0x40000, scoped, tag = 'output window, operand 0']
    %8 = vsyncpa [#allocation3], 0
    %s9 = scalar_lea.sflag [#allocation3], 1
    %10 = vsyncpa %s9, 0
    %11 = vsyncpa [#allocation6], 0
    %12 = vsyncpa [#allocation4], 0
    %s13 = scalar_lea.sflag [#allocation4], 1
    %14 = vsyncpa %s13, 0
    loop: start=0, step=1, limit=4
    $region2: #{separable_conv2d_same.1} parent=1 // loop_pre_header
      _
    $region3: #{separable_conv2d_same.1} parent=1 // loop_header
      %s16 = sphi 0, %s20
      %p17 = scmp.ge.s32.totalorder %s16, 4
      %s23 = sphi 0, %s49
      %s24 = sphi 0, %s45
      %s25 = sphi 0, %s41
      %s26 = sphi 0, %s37
      %s27 = sphi 0, %s23
      %s28 = sphi 0, %s24
      %s29 = sphi 0, %s25
      %s30 = sphi 0, %s26
      %s31 = sphi 0, %s27
      %s32 = sphi 0, %s28
      %s33 = sphi 0, %s29
      %s34 = sphi 0, %s30
      %s56 = sphi 0, %s58
      %s59 = sphi 0, %s56
      %s60 = sphi 0, %s59
      %s76 = sphi 0, %s60
      %s82 = sphi 0, %s84
      %s85 = sphi 0, %s82
      %s86 = sphi 0, %s85
      %s102 = sphi 0, %s86
      %s110 = sphi 0, %s112
      %s113 = sphi 0, %s110
      %s114 = sphi 0, %s113
      %s130 = sphi 0, %s114
      %s140 = sphi 0, %s142
      %s143 = sphi 0, %s140
      %s144 = sphi 0, %s143
      %s160 = sphi 0, %s144
    $region4: #{separable_conv2d_same.1} parent=1 // loop_header_branch
      %19 = sbr.rel (%p17) target = $region8
    $region5: #{separable_conv2d_same.1} parent=1 // loop_body
      %s21 = ssub.s32 %s16, 1
      %s22 = ssub.s32 %s16, 2
      %s35 = sadd.s32 1, %s26
      %p36 = scmp.ge.s32.totalorder %s35, 1
      %s37 = scalar_select %p36, 0, %s35
      %s38 = sadd.s32 1, %s25
      %s39 = scalar_select %p36, %s38, %s25
      %p40 = scmp.ge.s32.totalorder %s39, 1
      %s41 = scalar_select %p40, 0, %s39
      %s42 = sadd.s32 1, %s24
      %s43 = scalar_select %p40, %s42, %s24
      %p44 = scmp.ge.s32.totalorder %s43, 1
      %s45 = scalar_select %p44, 0, %s43
      %s46 = sadd.s32 1, %s23
      %s47 = scalar_select %p44, %s46, %s23
      %p48 = scmp.ge.s32.totalorder %s47, 2
      %s49 = scalar_select %p48, 0, %s47
      %s50 = ssub.s32 %s23, %s49
      %s51 = ssub.s32 %s24, %s45
      %s52 = sor.u32 %s50, %s51
      %s53 = ssub.s32 %s26, %s37
      %s54 = sor.u32 %s52, %s53
      %p55 = scmp.eq.s32.totalorder %s54, 0
      %s57 = sadd.s32 %s56, 1
      %s58 = scalar_select %p55, %s56, %s57
      %p61 = pneg %p55
      %p62 = scmp.eq.s32.totalorder %s16, 1
      %p63 = por %p61, %p62
      %p64 = scmp.ne.s32.totalorder %s56, %s59
      %p65 = scmp.eq.s32.totalorder %s16, 0
      %p66 = por %p64, %p65
      %p67 = scmp.ne.s32.totalorder %s56, %s59
      %p68 = scmp.eq.s32.totalorder %s21, 1
      %p69 = por %p67, %p68
      %p70 = scmp.ne.s32.totalorder %s59, %s60
      %p71 = scmp.eq.s32.totalorder %s21, 0
      %p72 = por %p70, %p71
      %p73 = scmp.ne.s32.totalorder %s59, %s60
      %p74 = scmp.eq.s32.totalorder %s22, 1
      %p75 = por %p73, %p74
      %p77 = scmp.ne.s32.totalorder %s60, %s76
      %p78 = scmp.eq.s32.totalorder %s22, 0
      %p79 = por %p77, %p78
      %s80 = ssub.s32 %s26, %s37
      %p81 = scmp.eq.s32.totalorder %s80, 0
      %s83 = sadd.s32 %s82, 1
      %s84 = scalar_select %p81, %s82, %s83
      %p87 = pneg %p81
      %p88 = scmp.eq.s32.totalorder %s16, 1
      %p89 = por %p87, %p88
      %p90 = scmp.ne.s32.totalorder %s82, %s85
      %p91 = scmp.eq.s32.totalorder %s16, 0
      %p92 = por %p90, %p91
      %p93 = scmp.ne.s32.totalorder %s82, %s85
      %p94 = scmp.eq.s32.totalorder %s21, 1
      %p95 = por %p93, %p94
      %p96 = scmp.ne.s32.totalorder %s85, %s86
      %p97 = scmp.eq.s32.totalorder %s21, 0
      %p98 = por %p96, %p97
      %p99 = scmp.ne.s32.totalorder %s85, %s86
      %p100 = scmp.eq.s32.totalorder %s22, 1
      %p101 = por %p99, %p100
      %p103 = scmp.ne.s32.totalorder %s86, %s102
      %p104 = scmp.eq.s32.totalorder %s22, 0
      %p105 = por %p103, %p104
      %s106 = ssub.s32 %s26, %s37
      %s107 = ssub.s32 %s25, %s41
      %s108 = sor.u32 %s106, %s107
      %p109 = scmp.eq.s32.totalorder %s108, 0
      %s111 = sadd.s32 %s110, 1
      %s112 = scalar_select %p109, %s110, %s111
      %p115 = pneg %p109
      %p116 = scmp.eq.s32.totalorder %s16, 1
      %p117 = por %p115, %p116
      %p118 = scmp.ne.s32.totalorder %s110, %s113
      %p119 = scmp.eq.s32.totalorder %s16, 0
      %p120 = por %p118, %p119
      %p121 = scmp.ne.s32.totalorder %s110, %s113
      %p122 = scmp.eq.s32.totalorder %s21, 1
      %p123 = por %p121, %p122
      %p124 = scmp.ne.s32.totalorder %s113, %s114
      %p125 = scmp.eq.s32.totalorder %s21, 0
      %p126 = por %p124, %p125
      %p127 = scmp.ne.s32.totalorder %s113, %s114
      %p128 = scmp.eq.s32.totalorder %s22, 1
      %p129 = por %p127, %p128
      %p131 = scmp.ne.s32.totalorder %s114, %s130
      %p132 = scmp.eq.s32.totalorder %s22, 0
      %p133 = por %p131, %p132
      %s134 = ssub.s32 %s23, %s49
      %s135 = ssub.s32 %s24, %s45
      %s136 = sor.u32 %s134, %s135
      %s137 = ssub.s32 %s25, %s41
      %s138 = sor.u32 %s136, %s137
      %p139 = scmp.eq.s32.totalorder %s138, 0
      %s141 = sadd.s32 %s140, 1
      %s142 = scalar_select %p139, %s140, %s141
      %p145 = pneg %p139
      %p146 = scmp.eq.s32.totalorder %s16, 1
      %p147 = por %p145, %p146
      %p148 = scmp.ne.s32.totalorder %s140, %s143
      %p149 = scmp.eq.s32.totalorder %s16, 0
      %p150 = por %p148, %p149
      %p151 = scmp.ne.s32.totalorder %s140, %s143
      %p152 = scmp.eq.s32.totalorder %s21, 1
      %p153 = por %p151, %p152
      %p154 = scmp.ne.s32.totalorder %s143, %s144
      %p155 = scmp.eq.s32.totalorder %s21, 0
      %p156 = por %p154, %p155
      %p157 = scmp.ne.s32.totalorder %s143, %s144
      %p158 = scmp.eq.s32.totalorder %s22, 1
      %p159 = por %p157, %p158
      %p161 = scmp.ne.s32.totalorder %s144, %s160
      %p162 = scmp.eq.s32.totalorder %s22, 0
      %p163 = por %p161, %p162
      %p164 = scmp.le.s32.totalorder 1, %s16
      %p165 = scmp.lt.s32.totalorder %s16, 3
      %p166 = pnand %p164, %p165
      %p167 = pneg %p166
      // Predicated region
      $region9: #{separable_conv2d_same.1} parent=5 // pred_check
        _
      $region10: #{separable_conv2d_same.1} parent=5 // pred_check_branch
        %169 = sbr.rel (%p166) target = $region12
      $region11: #{separable_conv2d_same.1} parent=5 // pred_region
        %s170 = ssub.s32 %s16, 1
        // Predicated region
        $region13: #{separable_conv2d_same.1} parent=11 // pred_check
          %p171 = pneg %p98
        $region14: #{separable_conv2d_same.1} parent=11 // pred_check_branch
          %173 = sbr.rel (%p171) target = $region16
        $region15: #{separable_conv2d_same.1} parent=11 // pred_region
          %s175 = ssub.s32 256, 256
          %176 = vsyncadd [#allocation6], %s175
          %s177 = smul.addr %s30, 128
          %s178 = scalar_lea.hbm %s1, %s177
          %s179 = sshll.u32 [#allocation5], 4
          %s180 = int_to_ptr.vmem [resolvable:$true] %s179
          %185 = dma.hbm_to_vmem [thread:$0]  %s178, 256, %s180, [#allocation6], 128, 128, 8
        $region16: #{separable_conv2d_same.1} parent=11 // pred_fallthru
          _
        // Predicated region
        $region17: #{separable_conv2d_same.1} parent=11 // pred_check
          %p186 = pneg %p126
        $region18: #{separable_conv2d_same.1} parent=11 // pred_check_branch
          %188 = sbr.rel (%p186) target = $region20
        $region19: #{separable_conv2d_same.1} parent=11 // pred_region
          %s189 = smul.u32 4, %s30
          %s191 = ssub.s32 256, 256
          %192 = vsyncadd [#allocation6], %s191
          %s193 = sadd.s32 %s29, %s189
          %s194 = smul.addr %s193, 64
          %s195 = scalar_lea.hbm %s2, %s194
          %s196 = sshll.u32 [#allocation7], 4
          %s197 = int_to_ptr.vmem [resolvable:$true] %s196
          %202 = dma.hbm_to_vmem [thread:$0]  %s195, 256, %s197, [#allocation6], 64, 64, 4
        $region20: #{separable_conv2d_same.1} parent=11 // pred_fallthru
          _
      $region12: #{separable_conv2d_same.1} parent=5 // pred_fallthru
        _
      %p203 = scmp.lt.s32.totalorder %s16, 2
      // Predicated region
      $region21: #{separable_conv2d_same.1} parent=5 // pred_check
        %p204 = pneg %p203
      $region22: #{separable_conv2d_same.1} parent=5 // pred_check_branch
        %206 = sbr.rel (%p204) target = $region24
      $region23: #{separable_conv2d_same.1} parent=5 // pred_region
        // Predicated region
        $region25: #{separable_conv2d_same.1} parent=23 // pred_check
          %p207 = pneg %p66
        $region26: #{separable_conv2d_same.1} parent=23 // pred_check_branch
          %209 = sbr.rel (%p207) target = $region28
        $region27: #{separable_conv2d_same.1} parent=23 // pred_region
          %s210 = sand.u32 %s56, 1
          %s211 = scalar_lea.sflag [#allocation3], %s210
          %s212 = sand.u32 %s56, 1
          %s213 = smul.addr %s212, 216
          %s214 = scalar_lea.vmem [#allocation2], %s213
          %s216 = ssub.s32 3456, 3456
          %217 = vsyncadd %s211, %s216
          %s218 = smul.addr %s24, 54
          %s219 = sadd.s32 %s26, %s218
          %s220 = smul.addr %s23, 54
          %s221 = sadd.s32 %s219, %s220
          %s222 = smul.addr %s221, 64
          %s223 = scalar_lea.hbm %s0, %s222
          %s224 = sshll.u32 %s214, 4
          %s225 = int_to_ptr.vmem [resolvable:$true] %s224
          %230 = dma.hbm_to_vmem [thread:$0]  %s223, 3456, %s225, %s211, 64, 64, 4
        $region28: #{separable_conv2d_same.1} parent=23 // pred_fallthru
          _
      $region24: #{separable_conv2d_same.1} parent=5 // pred_fallthru
        _
      %p231 = scmp.le.s32.totalorder 1, %s16
      %p232 = scmp.lt.s32.totalorder %s16, 3
      %p233 = pnand %p231, %p232
      %p234 = pneg %p233
      // Predicated region
      $region29: #{separable_conv2d_same.1} parent=5 // pred_check
        _
      $region30: #{separable_conv2d_same.1} parent=5 // pred_check_branch
        %236 = sbr.rel (%p233) target = $region32
      $region31: #{separable_conv2d_same.1} parent=5 // pred_region
        %s237 = ssub.s32 %s16, 1
        %s238 = sand.u32 %s59, 1
        %s239 = scalar_lea.sflag [#allocation3], %s238
        %s240 = sand.u32 %s59, 1
        %s241 = smul.addr %s240, 216
        %s242 = scalar_lea.vmem [#allocation2], %s241
        // Predicated region
        $region33: #{separable_conv2d_same.1} parent=31 // pred_check
          %p243 = pneg %p72
        $region34: #{separable_conv2d_same.1} parent=31 // pred_check_branch
          %245 = sbr.rel (%p243) target = $region36
        $region35: #{separable_conv2d_same.1} parent=31 // pred_region
          %246 = dma.done %s239, 3456
        $region36: #{separable_conv2d_same.1} parent=31 // pred_fallthru
          _
        // Predicated region
        $region37: #{separable_conv2d_same.1} parent=31 // pred_check
          %p247 = pneg %p98
        $region38: #{separable_conv2d_same.1} parent=31 // pred_check_branch
          %249 = sbr.rel (%p247) target = $region40
        $region39: #{separable_conv2d_same.1} parent=31 // pred_region
          %250 = dma.done [#allocation6], 256
        $region40: #{separable_conv2d_same.1} parent=31 // pred_fallthru
          _
        // Predicated region
        $region41: #{separable_conv2d_same.1} parent=31 // pred_check
          %p251 = pneg %p126
        $region42: #{separable_conv2d_same.1} parent=31 // pred_check_branch
          %253 = sbr.rel (%p251) target = $region44
        $region43: #{separable_conv2d_same.1} parent=31 // pred_region
          %254 = dma.done [#allocation6], 256
        $region44: #{separable_conv2d_same.1} parent=31 // pred_fallthru
          _
        %s255 = sand.u32 %s59, 1
        %s256 = scalar_lea.sflag [#allocation3], %s255
        %s257 = sand.u32 %s59, 1
        %s258 = smul.addr %s257, 216
        %s259 = scalar_lea.vmem [#allocation2], %s258
        %p260 = pneg %p72
        %p261 = pneg %p69
        %p262 = pneg %p98
        %p263 = pneg %p95
        %p264 = pneg %p126
        %p265 = pneg %p123
        %p266 = pneg %p156
        %p267 = pneg %p153
        %s268 = sand.u32 %s143, 1
        %s269 = scalar_lea.sflag [#allocation4], %s268
        %s270 = sand.u32 %s143, 1
        %s271 = smul.addr %s270, 256
        %s272 = scalar_lea.vmem [#allocation8], %s271
        %s273 = smul.u32 4, %s30
        %s274 = smul.u32 16, %s28
        %v276 = vld [vmem:[%s242] sm:$0xf]
        %v277 = vld [vmem:[%s242 + $0x4] sm:$0xf]
        %v278 = vld [vmem:[%s242 + $0xc] sm:$0xf]
        %v279 = vld [vmem:[%s242 + $0x10] sm:$0xf]
        %v280 = vld [vmem:[%s242 + $0x18] sm:$0xf]
        %v281 = vld [vmem:[%s242 + $0x1c] sm:$0xf]
        %v282 = vld [vmem:[%s242 + $0x24] sm:$0xf]
        %v283 = vld [vmem:[%s242 + $0x28] sm:$0xf]
        %v284 = vld [vmem:[%s242 + $0x30] sm:$0xf]
        %v285 = vld [vmem:[%s242 + $0x34] sm:$0xf]
        %v286 = vld [vmem:[%s242 + $0x3c] sm:$0xf]
        %v287 = vld [vmem:[%s242 + $0x40] sm:$0xf]
        %v288 = vld [vmem:[%s242 + $0x48] sm:$0xf]
        %v289 = vld [vmem:[%s242 + $0x4c] sm:$0xf]
        %v290 = vld [vmem:[%s242 + $0x54] sm:$0xf]
        %v291 = vld [vmem:[%s242 + $0x58] sm:$0xf]
        %v292 = vld [vmem:[%s242 + $0x60] sm:$0xf]
        %v293 = vld [vmem:[%s242 + $0x64] sm:$0xf]
        %v294 = vld [vmem:[%s242 + $0x6c] sm:$0xf]
        %v295 = vld [vmem:[%s242 + $0x70] sm:$0xf]
        %v296 = vld [vmem:[%s242 + $0x78] sm:$0xf]
        %v297 = vld [vmem:[%s242 + $0x7c] sm:$0xf]
        %v298 = vld [vmem:[%s242 + $0x84] sm:$0xf]
        %v299 = vld [vmem:[%s242 + $0x88] sm:$0xf]
        %v300 = vld [vmem:[%s242 + $0x90] sm:$0xf]
        %v301 = vld [vmem:[%s242 + $0x94] sm:$0xf]
        %v302 = vld [vmem:[%s242 + $0x9c] sm:$0xf]
        %v303 = vld [vmem:[%s242 + $0xa0] sm:$0xf]
        %v304 = vld [vmem:[%s242 + $0xa8] sm:$0xf]
        %v305 = vld [vmem:[%s242 + $0xac] sm:$0xf]
        %v306 = vld [vmem:[%s242 + $0xb4] sm:$0xf]
        %v307 = vld [vmem:[%s242 + $0xb8] sm:$0xf]
        %v308 = vunpack.c.l.bf16 %v276
        %v309 = vunpack.c.l.bf16 %v277
        %v310 = vunpack.c.l.bf16 %v278
        %v311 = vunpack.c.l.bf16 %v279
        %v312 = vunpack.c.l.bf16 %v280
        %v313 = vunpack.c.l.bf16 %v281
        %v314 = vunpack.c.l.bf16 %v282
        %v315 = vunpack.c.l.bf16 %v283
        %v316 = vunpack.c.l.bf16 %v284
        %v317 = vunpack.c.l.bf16 %v285
        %v318 = vunpack.c.l.bf16 %v286
        %v319 = vunpack.c.l.bf16 %v287
        %v320 = vunpack.c.l.bf16 %v288
        %v321 = vunpack.c.l.bf16 %v289
        %v322 = vunpack.c.l.bf16 %v290
        %v323 = vunpack.c.l.bf16 %v291
        %v324 = vunpack.c.l.bf16 %v292
        %v325 = vunpack.c.l.bf16 %v293
        %v326 = vunpack.c.l.bf16 %v294
        %v327 = vunpack.c.l.bf16 %v295
        %v328 = vunpack.c.l.bf16 %v296
        %v329 = vunpack.c.l.bf16 %v297
        %v330 = vunpack.c.l.bf16 %v298
        %v331 = vunpack.c.l.bf16 %v299
        %v332 = vunpack.c.l.bf16 %v300
        %v333 = vunpack.c.l.bf16 %v301
        %v334 = vunpack.c.l.bf16 %v302
        %v335 = vunpack.c.l.bf16 %v303
        %v336 = vunpack.c.l.bf16 %v304
        %v337 = vunpack.c.l.bf16 %v305
        %v338 = vunpack.c.l.bf16 %v306
        %v339 = vunpack.c.l.bf16 %v307
        %v340 = vld [vmem:[#allocation5] sm:$0x1]
        %v341 = vlaneseq
        %v342 = vshrl.u32 %v341, 7
        %v343 = vsub.s32 0, %v342
        %v344 = vrot.slane %v340, %v343
        %v345 = vmul.f32 %v308, %v344
        %v346 = vmul.f32 %v309, %v344
        %v347 = vmul.f32 %v310, %v344
        %v348 = vmul.f32 %v311, %v344
        %v349 = vmul.f32 %v312, %v344
        %v350 = vmul.f32 %v313, %v344
        %v351 = vmul.f32 %v314, %v344
        %v352 = vmul.f32 %v315, %v344
        %v353 = vmul.f32 %v316, %v344
        %v354 = vmul.f32 %v317, %v344
        %v355 = vmul.f32 %v318, %v344
        %v356 = vmul.f32 %v319, %v344
        %v357 = vmul.f32 %v320, %v344
        %v358 = vmul.f32 %v321, %v344
        %v359 = vmul.f32 %v322, %v344
        %v360 = vmul.f32 %v323, %v344
        %v361 = vmul.f32 %v324, %v344
        %v362 = vmul.f32 %v325, %v344
        %v363 = vmul.f32 %v326, %v344
        %v364 = vmul.f32 %v327, %v344
        %v365 = vmul.f32 %v328, %v344
        %v366 = vmul.f32 %v329, %v344
        %v367 = vmul.f32 %v330, %v344
        %v368 = vmul.f32 %v331, %v344
        %v369 = vmul.f32 %v332, %v344
        %v370 = vmul.f32 %v333, %v344
        %v371 = vmul.f32 %v334, %v344
        %v372 = vmul.f32 %v335, %v344
        %v373 = vmul.f32 %v336, %v344
        %v374 = vmul.f32 %v337, %v344
        %v375 = vmul.f32 %v338, %v344
        %v376 = vmul.f32 %v339, %v344
        %v377 = vadd.f32 %v345, 0.0
        %v378 = vadd.f32 %v346, 0.0
        %v379 = vadd.f32 %v347, 0.0
        %v380 = vadd.f32 %v348, 0.0
        %v381 = vadd.f32 %v349, 0.0
        %v382 = vadd.f32 %v350, 0.0
        %v383 = vadd.f32 %v351, 0.0
        %v384 = vadd.f32 %v352, 0.0
        %v385 = vadd.f32 %v353, 0.0
        %v386 = vadd.f32 %v354, 0.0
        %v387 = vadd.f32 %v355, 0.0
        %v388 = vadd.f32 %v356, 0.0
        %v389 = vadd.f32 %v357, 0.0
        %v390 = vadd.f32 %v358, 0.0
        %v391 = vadd.f32 %v359, 0.0
        %v392 = vadd.f32 %v360, 0.0
        %v393 = vadd.f32 %v361, 0.0
        %v394 = vadd.f32 %v362, 0.0
        %v395 = vadd.f32 %v363, 0.0
        %v396 = vadd.f32 %v364, 0.0
        %v397 = vadd.f32 %v365, 0.0
        %v398 = vadd.f32 %v366, 0.0
        %v399 = vadd.f32 %v367, 0.0
        %v400 = vadd.f32 %v368, 0.0
        %v401 = vadd.f32 %v369, 0.0
        %v402 = vadd.f32 %v370, 0.0
        %v403 = vadd.f32 %v371, 0.0
        %v404 = vadd.f32 %v372, 0.0
        %v405 = vadd.f32 %v373, 0.0
        %v406 = vadd.f32 %v374, 0.0
        %v407 = vadd.f32 %v375, 0.0
        %v408 = vadd.f32 %v376, 0.0
        %v409 = vld [vmem:[%s242 + $0x8] sm:$0x1]
        %v410 = vld [vmem:[%s242 + $0x14] sm:$0x1]
        %v411 = vld [vmem:[%s242 + $0x20] sm:$0x1]
        %v412 = vld [vmem:[%s242 + $0x2c] sm:$0x1]
        %v413 = vld [vmem:[%s242 + $0x38] sm:$0x1]
        %v414 = vld [vmem:[%s242 + $0x44] sm:$0x1]
        %v415 = vld [vmem:[%s242 + $0x50] sm:$0x1]
        %v416 = vld [vmem:[%s242 + $0x5c] sm:$0x1]
        %v417 = vld [vmem:[%s242 + $0x68] sm:$0x1]
        %v418 = vld [vmem:[%s242 + $0x74] sm:$0x1]
        %v419 = vld [vmem:[%s242 + $0x80] sm:$0x1]
        %v420 = vld [vmem:[%s242 + $0x8c] sm:$0x1]
        %v421 = vld [vmem:[%s242 + $0x98] sm:$0x1]
        %v422 = vld [vmem:[%s242 + $0xa4] sm:$0x1]
        %v423 = vld [vmem:[%s242 + $0xb0] sm:$0x1]
        %v424 = vld [vmem:[%s242 + $0xbc] sm:$0x1]
        %v425 = vunpack.c.l.bf16 %v409
        %v426 = vunpack.c.l.bf16 %v410
        %v427 = vunpack.c.l.bf16 %v411
        %v428 = vunpack.c.l.bf16 %v412
        %v429 = vunpack.c.l.bf16 %v413
        %v430 = vunpack.c.l.bf16 %v414
        %v431 = vunpack.c.l.bf16 %v415
        %v432 = vunpack.c.l.bf16 %v416
        %v433 = vunpack.c.l.bf16 %v417
        %v434 = vunpack.c.l.bf16 %v418
        %v435 = vunpack.c.l.bf16 %v419
        %v436 = vunpack.c.l.bf16 %v420
        %v437 = vunpack.c.l.bf16 %v421
        %v438 = vunpack.c.l.bf16 %v422
        %v439 = vunpack.c.l.bf16 %v423
        %v440 = vunpack.c.l.bf16 %v424
        %v441 = vld [vmem:[#allocation5 + $0x1] sm:$0x1]
        %v442 = vlaneseq
        %v443 = vshrl.u32 %v442, 7
        %v444 = vsub.s32 0, %v443
        %v445 = vrot.slane %v441, %v444
        %v446 = vmul.f32 %v308, %v445
        %v447 = vmul.f32 %v309, %v445
        %v448 = vmul.f32 %v425, %v445
        %v449 = vmul.f32 %v310, %v445
        %v450 = vmul.f32 %v311, %v445
        %v451 = vmul.f32 %v426, %v445
        %v452 = vmul.f32 %v312, %v445
        %v453 = vmul.f32 %v313, %v445
        %v454 = vmul.f32 %v427, %v445
        %v455 = vmul.f32 %v314, %v445
        %v456 = vmul.f32 %v315, %v445
        %v457 = vmul.f32 %v428, %v445
        %v458 = vmul.f32 %v316, %v445
        %v459 = vmul.f32 %v317, %v445
        %v460 = vmul.f32 %v429, %v445
        %v461 = vmul.f32 %v318, %v445
        %v462 = vmul.f32 %v319, %v445
        %v463 = vmul.f32 %v430, %v445
        %v464 = vmul.f32 %v320, %v445
        %v465 = vmul.f32 %v321, %v445
        %v466 = vmul.f32 %v431, %v445
        %v467 = vmul.f32 %v322, %v445
        %v468 = vmul.f32 %v323, %v445
        %v469 = vmul.f32 %v432, %v445
        %v470 = vmul.f32 %v324, %v445
        %v471 = vmul.f32 %v325, %v445
        %v472 = vmul.f32 %v433, %v445
        %v473 = vmul.f32 %v326, %v445
        %v474 = vmul.f32 %v327, %v445
        %v475 = vmul.f32 %v434, %v445
        %v476 = vmul.f32 %v328, %v445
        %v477 = vmul.f32 %v329, %v445
        %v478 = vmul.f32 %v435, %v445
        %v479 = vmul.f32 %v330, %v445
        %v480 = vmul.f32 %v331, %v445
        %v481 = vmul.f32 %v436, %v445
        %v482 = vmul.f32 %v332, %v445
        %v483 = vmul.f32 %v333, %v445
        %v484 = vmul.f32 %v437, %v445
        %v485 = vmul.f32 %v334, %v445
        %v486 = vmul.f32 %v335, %v445
        %v487 = vmul.f32 %v438, %v445
        %v488 = vmul.f32 %v336, %v445
        %v489 = vmul.f32 %v337, %v445
        %v490 = vmul.f32 %v439, %v445
        %v491 = vmul.f32 %v338, %v445
        %v492 = vmul.f32 %v339, %v445
        %v493 = vmul.f32 %v440, %v445
        %vm542 = vcmask 1046528
        %v543 = vrot.slane %v446, 1
        %v544 = vrot.slane %v447, 1
        %v545 = vsel %vm542, %v543, %v544
        %v546 = vrot.slane %v448, 1
        %v547 = vsel %vm542, %v544, %v546
        %v548 = vrot.slane %v449, 1
        %v549 = vrot.slane %v450, 1
        %v550 = vsel %vm542, %v548, %v549
        %v551 = vrot.slane %v451, 1
        %v552 = vsel %vm542, %v549, %v551
        %v553 = vrot.slane %v452, 1
        %v554 = vrot.slane %v453, 1
        %v555 = vsel %vm542, %v553, %v554
        %v556 = vrot.slane %v454, 1
        %v557 = vsel %vm542, %v554, %v556
        %v558 = vrot.slane %v455, 1
        %v559 = vrot.slane %v456, 1
        %v560 = vsel %vm542, %v558, %v559
        %v561 = vrot.slane %v457, 1
        %v562 = vsel %vm542, %v559, %v561
        %v563 = vrot.slane %v458, 1
        %v564 = vrot.slane %v459, 1
        %v565 = vsel %vm542, %v563, %v564
        %v566 = vrot.slane %v460, 1
        %v567 = vsel %vm542, %v564, %v566
        %v568 = vrot.slane %v461, 1
        %v569 = vrot.slane %v462, 1
        %v570 = vsel %vm542, %v568, %v569
        %v571 = vrot.slane %v463, 1
        %v572 = vsel %vm542, %v569, %v571
        %v573 = vrot.slane %v464, 1
        %v574 = vrot.slane %v465, 1
        %v575 = vsel %vm542, %v573, %v574
        %v576 = vrot.slane %v466, 1
        %v577 = vsel %vm542, %v574, %v576
        %v578 = vrot.slane %v467, 1
        %v579 = vrot.slane %v468, 1
        %v580 = vsel %vm542, %v578, %v579
        %v581 = vrot.slane %v469, 1
        %v582 = vsel %vm542, %v579, %v581
        %v583 = vrot.slane %v470, 1
        %v584 = vrot.slane %v471, 1
        %v585 = vsel %vm542, %v583, %v584
        %v586 = vrot.slane %v472, 1
        %v587 = vsel %vm542, %v584, %v586
        %v588 = vrot.slane %v473, 1
        %v589 = vrot.slane %v474, 1
        %v590 = vsel %vm542, %v588, %v589
        %v591 = vrot.slane %v475, 1
        %v592 = vsel %vm542, %v589, %v591
        %v593 = vrot.slane %v476, 1
        %v594 = vrot.slane %v477, 1
        %v595 = vsel %vm542, %v593, %v594
        %v596 = vrot.slane %v478, 1
        %v597 = vsel %vm542, %v594, %v596
        %v598 = vrot.slane %v479, 1
        %v599 = vrot.slane %v480, 1
        %v600 = vsel %vm542, %v598, %v599
        %v601 = vrot.slane %v481, 1
        %v602 = vsel %vm542, %v599, %v601
        %v603 = vrot.slane %v482, 1
        %v604 = vrot.slane %v483, 1
        %v605 = vsel %vm542, %v603, %v604
        %v606 = vrot.slane %v484, 1
        %v607 = vsel %vm542, %v604, %v606
        %v608 = vrot.slane %v485, 1
        %v609 = vrot.slane %v486, 1
        %v610 = vsel %vm542, %v608, %v609
        %v611 = vrot.slane %v487, 1
        %v612 = vsel %vm542, %v609, %v611
        %v613 = vrot.slane %v488, 1
        %v614 = vrot.slane %v489, 1
        %v615 = vsel %vm542, %v613, %v614
        %v616 = vrot.slane %v490, 1
        %v617 = vsel %vm542, %v614, %v616
        %v618 = vrot.slane %v491, 1
        %v619 = vrot.slane %v492, 1
        %v620 = vsel %vm542, %v618, %v619
        %v621 = vrot.slane %v493, 1
        %v622 = vsel %vm542, %v619, %v621
        %v655 = vadd.f32 %v377, %v545
        %v656 = vadd.f32 %v378, %v547
        %v657 = vadd.f32 %v379, %v550
        %v658 = vadd.f32 %v380, %v552
        %v659 = vadd.f32 %v381, %v555
        %v660 = vadd.f32 %v382, %v557
        %v661 = vadd.f32 %v383, %v560
        %v662 = vadd.f32 %v384, %v562
        %v663 = vadd.f32 %v385, %v565
        %v664 = vadd.f32 %v386, %v567
        %v665 = vadd.f32 %v387, %v570
        %v666 = vadd.f32 %v388, %v572
        %v667 = vadd.f32 %v389, %v575
        %v668 = vadd.f32 %v390, %v577
        %v669 = vadd.f32 %v391, %v580
        %v670 = vadd.f32 %v392, %v582
        %v671 = vadd.f32 %v393, %v585
        %v672 = vadd.f32 %v394, %v587
        %v673 = vadd.f32 %v395, %v590
        %v674 = vadd.f32 %v396, %v592
        %v675 = vadd.f32 %v397, %v595
        %v676 = vadd.f32 %v398, %v597
        %v677 = vadd.f32 %v399, %v600
        %v678 = vadd.f32 %v400, %v602
        %v679 = vadd.f32 %v401, %v605
        %v680 = vadd.f32 %v402, %v607
        %v681 = vadd.f32 %v403, %v610
        %v682 = vadd.f32 %v404, %v612
        %v683 = vadd.f32 %v405, %v615
        %v684 = vadd.f32 %v406, %v617
        %v685 = vadd.f32 %v407, %v620
        %v686 = vadd.f32 %v408, %v622
        %v687 = vld [vmem:[%s242] sm:$0xe]
        %v688 = vld [vmem:[%s242 + $0xc] sm:$0xe]
        %v689 = vld [vmem:[%s242 + $0x18] sm:$0xe]
        %v690 = vld [vmem:[%s242 + $0x24] sm:$0xe]
        %v691 = vld [vmem:[%s242 + $0x30] sm:$0xe]
        %v692 = vld [vmem:[%s242 + $0x3c] sm:$0xe]
        %v693 = vld [vmem:[%s242 + $0x48] sm:$0xe]
        %v694 = vld [vmem:[%s242 + $0x54] sm:$0xe]
        %v695 = vld [vmem:[%s242 + $0x60] sm:$0xe]
        %v696 = vld [vmem:[%s242 + $0x6c] sm:$0xe]
        %v697 = vld [vmem:[%s242 + $0x78] sm:$0xe]
        %v698 = vld [vmem:[%s242 + $0x84] sm:$0xe]
        %v699 = vld [vmem:[%s242 + $0x90] sm:$0xe]
        %v700 = vld [vmem:[%s242 + $0x9c] sm:$0xe]
        %v701 = vld [vmem:[%s242 + $0xa8] sm:$0xe]
        %v702 = vld [vmem:[%s242 + $0xb4] sm:$0xe]
        %v703 = vunpack.c.l.bf16 %v687
        %v704 = vunpack.c.l.bf16 %v688
        %v705 = vunpack.c.l.bf16 %v689
        %v706 = vunpack.c.l.bf16 %v690
        %v707 = vunpack.c.l.bf16 %v691
        %v708 = vunpack.c.l.bf16 %v692
        %v709 = vunpack.c.l.bf16 %v693
        %v710 = vunpack.c.l.bf16 %v694
        %v711 = vunpack.c.l.bf16 %v695
        %v712 = vunpack.c.l.bf16 %v696
        %v713 = vunpack.c.l.bf16 %v697
        %v714 = vunpack.c.l.bf16 %v698
        %v715 = vunpack.c.l.bf16 %v699
        %v716 = vunpack.c.l.bf16 %v700
        %v717 = vunpack.c.l.bf16 %v701
        %v718 = vunpack.c.l.bf16 %v702
        %v719 = vld [vmem:[#allocation5 + $0x2] sm:$0x1]
        %v720 = vlaneseq
        %v721 = vshrl.u32 %v720, 7
        %v722 = vsub.s32 0, %v721
        %v723 = vrot.slane %v719, %v722
        %v724 = vmul.f32 %v703, %v723
        %v725 = vmul.f32 %v309, %v723
        %v726 = vmul.f32 %v425, %v723
        %v727 = vmul.f32 %v704, %v723
        %v728 = vmul.f32 %v311, %v723
        %v729 = vmul.f32 %v426, %v723
        %v730 = vmul.f32 %v705, %v723
        %v731 = vmul.f32 %v313, %v723
        %v732 = vmul.f32 %v427, %v723
        %v733 = vmul.f32 %v706, %v723
        %v734 = vmul.f32 %v315, %v723
        %v735 = vmul.f32 %v428, %v723
        %v736 = vmul.f32 %v707, %v723
        %v737 = vmul.f32 %v317, %v723
        %v738 = vmul.f32 %v429, %v723
        %v739 = vmul.f32 %v708, %v723
        %v740 = vmul.f32 %v319, %v723
        %v741 = vmul.f32 %v430, %v723
        %v742 = vmul.f32 %v709, %v723
        %v743 = vmul.f32 %v321, %v723
        %v744 = vmul.f32 %v431, %v723
        %v745 = vmul.f32 %v710, %v723
        %v746 = vmul.f32 %v323, %v723
        %v747 = vmul.f32 %v432, %v723
        %v748 = vmul.f32 %v711, %v723
        %v749 = vmul.f32 %v325, %v723
        %v750 = vmul.f32 %v433, %v723
        %v751 = vmul.f32 %v712, %v723
        %v752 = vmul.f32 %v327, %v723
        %v753 = vmul.f32 %v434, %v723
        %v754 = vmul.f32 %v713, %v723
        %v755 = vmul.f32 %v329, %v723
        %v756 = vmul.f32 %v435, %v723
        %v757 = vmul.f32 %v714, %v723
        %v758 = vmul.f32 %v331, %v723
        %v759 = vmul.f32 %v436, %v723
        %v760 = vmul.f32 %v715, %v723
        %v761 = vmul.f32 %v333, %v723
        %v762 = vmul.f32 %v437, %v723
        %v763 = vmul.f32 %v716, %v723
        %v764 = vmul.f32 %v335, %v723
        %v765 = vmul.f32 %v438, %v723
        %v766 = vmul.f32 %v717, %v723
        %v767 = vmul.f32 %v337, %v723
        %v768 = vmul.f32 %v439, %v723
        %v769 = vmul.f32 %v718, %v723
        %v770 = vmul.f32 %v339, %v723
        %v771 = vmul.f32 %v440, %v723
        %vm820 = vcmask 1045504
        %v821 = vrot.slane %v724, 2
        %v822 = vrot.slane %v725, 2
        %v823 = vsel %vm820, %v821, %v822
        %v824 = vrot.slane %v726, 2
        %v825 = vsel %vm820, %v822, %v824
        %v826 = vrot.slane %v727, 2
        %v827 = vrot.slane %v728, 2
        %v828 = vsel %vm820, %v826, %v827
        %v829 = vrot.slane %v729, 2
        %v830 = vsel %vm820, %v827, %v829
        %v831 = vrot.slane %v730, 2
        %v832 = vrot.slane %v731, 2
        %v833 = vsel %vm820, %v831, %v832
        %v834 = vrot.slane %v732, 2
        %v835 = vsel %vm820, %v832, %v834
        %v836 = vrot.slane %v733, 2
        %v837 = vrot.slane %v734, 2
        %v838 = vsel %vm820, %v836, %v837
        %v839 = vrot.slane %v735, 2
        %v840 = vsel %vm820, %v837, %v839
        %v841 = vrot.slane %v736, 2
        %v842 = vrot.slane %v737, 2
        %v843 = vsel %vm820, %v841, %v842
        %v844 = vrot.slane %v738, 2
        %v845 = vsel %vm820, %v842, %v844
        %v846 = vrot.slane %v739, 2
        %v847 = vrot.slane %v740, 2
        %v848 = vsel %vm820, %v846, %v847
        %v849 = vrot.slane %v741, 2
        %v850 = vsel %vm820, %v847, %v849
        %v851 = vrot.slane %v742, 2
        %v852 = vrot.slane %v743, 2
        %v853 = vsel %vm820, %v851, %v852
        %v854 = vrot.slane %v744, 2
        %v855 = vsel %vm820, %v852, %v854
        %v856 = vrot.slane %v745, 2
        %v857 = vrot.slane %v746, 2
        %v858 = vsel %vm820, %v856, %v857
        %v859 = vrot.slane %v747, 2
        %v860 = vsel %vm820, %v857, %v859
        %v861 = vrot.slane %v748, 2
        %v862 = vrot.slane %v749, 2
        %v863 = vsel %vm820, %v861, %v862
        %v864 = vrot.slane %v750, 2
        %v865 = vsel %vm820, %v862, %v864
        %v866 = vrot.slane %v751, 2
        %v867 = vrot.slane %v752, 2
        %v868 = vsel %vm820, %v866, %v867
        %v869 = vrot.slane %v753, 2
        %v870 = vsel %vm820, %v867, %v869
        %v871 = vrot.slane %v754, 2
        %v872 = vrot.slane %v755, 2
        %v873 = vsel %vm820, %v871, %v872
        %v874 = vrot.slane %v756, 2
        %v875 = vsel %vm820, %v872, %v874
        %v876 = vrot.slane %v757, 2
        %v877 = vrot.slane %v758, 2
        %v878 = vsel %vm820, %v876, %v877
        %v879 = vrot.slane %v759, 2
        %v880 = vsel %vm820, %v877, %v879
        %v881 = vrot.slane %v760, 2
        %v882 = vrot.slane %v761, 2
        %v883 = vsel %vm820, %v881, %v882
        %v884 = vrot.slane %v762, 2
        %v885 = vsel %vm820, %v882, %v884
        %v886 = vrot.slane %v763, 2
        %v887 = vrot.slane %v764, 2
        %v888 = vsel %vm820, %v886, %v887
        %v889 = vrot.slane %v765, 2
        %v890 = vsel %vm820, %v887, %v889
        %v891 = vrot.slane %v766, 2
        %v892 = vrot.slane %v767, 2
        %v893 = vsel %vm820, %v891, %v892
        %v894 = vrot.slane %v768, 2
        %v895 = vsel %vm820, %v892, %v894
        %v896 = vrot.slane %v769, 2
        %v897 = vrot.slane %v770, 2
        %v898 = vsel %vm820, %v896, %v897
        %v899 = vrot.slane %v771, 2
        %v900 = vsel %vm820, %v897, %v899
        %v933 = vadd.f32 %v655, %v823
        %v934 = vadd.f32 %v656, %v825
        %v935 = vadd.f32 %v657, %v828
        %v936 = vadd.f32 %v658, %v830
        %v937 = vadd.f32 %v659, %v833
        %v938 = vadd.f32 %v660, %v835
        %v939 = vadd.f32 %v661, %v838
        %v940 = vadd.f32 %v662, %v840
        %v941 = vadd.f32 %v663, %v843
        %v942 = vadd.f32 %v664, %v845
        %v943 = vadd.f32 %v665, %v848
        %v944 = vadd.f32 %v666, %v850
        %v945 = vadd.f32 %v667, %v853
        %v946 = vadd.f32 %v668, %v855
        %v947 = vadd.f32 %v669, %v858
        %v948 = vadd.f32 %v670, %v860
        %v949 = vadd.f32 %v671, %v863
        %v950 = vadd.f32 %v672, %v865
        %v951 = vadd.f32 %v673, %v868
        %v952 = vadd.f32 %v674, %v870
        %v953 = vadd.f32 %v675, %v873
        %v954 = vadd.f32 %v676, %v875
        %v955 = vadd.f32 %v677, %v878
        %v956 = vadd.f32 %v678, %v880
        %v957 = vadd.f32 %v679, %v883
        %v958 = vadd.f32 %v680, %v885
        %v959 = vadd.f32 %v681, %v888
        %v960 = vadd.f32 %v682, %v890
        %v961 = vadd.f32 %v683, %v893
        %v962 = vadd.f32 %v684, %v895
        %v963 = vadd.f32 %v685, %v898
        %v964 = vadd.f32 %v686, %v900
        %s965 = scalar_lea.vmem %s242, 12 [#allocation2]
        %v966 = vld [vmem:[%s965] sm:$0xf]
        %v967 = vld [vmem:[%s965 + $0x4] sm:$0xf]
        %v968 = vld [vmem:[%s965 + $0xc] sm:$0xf]
        %v969 = vld [vmem:[%s965 + $0x10] sm:$0xf]
        %v970 = vld [vmem:[%s965 + $0x18] sm:$0xf]
        %v971 = vld [vmem:[%s965 + $0x1c] sm:$0xf]
        %v972 = vld [vmem:[%s965 + $0x24] sm:$0xf]
        %v973 = vld [vmem:[%s965 + $0x28] sm:$0xf]
        %v974 = vld [vmem:[%s965 + $0x30] sm:$0xf]
        %v975 = vld [vmem:[%s965 + $0x34] sm:$0xf]
        %v976 = vld [vmem:[%s965 + $0x3c] sm:$0xf]
        %v977 = vld [vmem:[%s965 + $0x40] sm:$0xf]
        %v978 = vld [vmem:[%s965 + $0x48] sm:$0xf]
        %v979 = vld [vmem:[%s965 + $0x4c] sm:$0xf]
        %v980 = vld [vmem:[%s965 + $0x54] sm:$0xf]
        %v981 = vld [vmem:[%s965 + $0x58] sm:$0xf]
        %v982 = vld [vmem:[%s965 + $0x60] sm:$0xf]
        %v983 = vld [vmem:[%s965 + $0x64] sm:$0xf]
        %v984 = vld [vmem:[%s965 + $0x6c] sm:$0xf]
        %v985 = vld [vmem:[%s965 + $0x70] sm:$0xf]
        %v986 = vld [vmem:[%s965 + $0x78] sm:$0xf]
        %v987 = vld [vmem:[%s965 + $0x7c] sm:$0xf]
        %v988 = vld [vmem:[%s965 + $0x84] sm:$0xf]
        %v989 = vld [vmem:[%s965 + $0x88] sm:$0xf]
        %v990 = vld [vmem:[%s965 + $0x90] sm:$0xf]
        %v991 = vld [vmem:[%s965 + $0x94] sm:$0xf]
        %v992 = vld [vmem:[%s965 + $0x9c] sm:$0xf]
        %v993 = vld [vmem:[%s965 + $0xa0] sm:$0xf]
        %v994 = vld [vmem:[%s965 + $0xa8] sm:$0xf]
        %v995 = vld [vmem:[%s965 + $0xac] sm:$0xf]
        %v996 = vld [vmem:[%s965 + $0xb4] sm:$0xf]
        %v997 = vld [vmem:[%s965 + $0xb8] sm:$0xf]
        %v998 = vunpack.c.l.bf16 %v966
        %v999 = vunpack.c.l.bf16 %v967
        %v1000 = vunpack.c.l.bf16 %v968
        %v1001 = vunpack.c.l.bf16 %v969
        %v1002 = vunpack.c.l.bf16 %v970
        %v1003 = vunpack.c.l.bf16 %v971
        %v1004 = vunpack.c.l.bf16 %v972
        %v1005 = vunpack.c.l.bf16 %v973
        %v1006 = vunpack.c.l.bf16 %v974
        %v1007 = vunpack.c.l.bf16 %v975
        %v1008 = vunpack.c.l.bf16 %v976
        %v1009 = vunpack.c.l.bf16 %v977
        %v1010 = vunpack.c.l.bf16 %v978
        %v1011 = vunpack.c.l.bf16 %v979
        %v1012 = vunpack.c.l.bf16 %v980
        %v1013 = vunpack.c.l.bf16 %v981
        %v1014 = vunpack.c.l.bf16 %v982
        %v1015 = vunpack.c.l.bf16 %v983
        %v1016 = vunpack.c.l.bf16 %v984
        %v1017 = vunpack.c.l.bf16 %v985
        %v1018 = vunpack.c.l.bf16 %v986
        %v1019 = vunpack.c.l.bf16 %v987
        %v1020 = vunpack.c.l.bf16 %v988
        %v1021 = vunpack.c.l.bf16 %v989
        %v1022 = vunpack.c.l.bf16 %v990
        %v1023 = vunpack.c.l.bf16 %v991
        %v1024 = vunpack.c.l.bf16 %v992
        %v1025 = vunpack.c.l.bf16 %v993
        %v1026 = vunpack.c.l.bf16 %v994
        %v1027 = vunpack.c.l.bf16 %v995
        %v1028 = vunpack.c.l.bf16 %v996
        %v1029 = vunpack.c.l.bf16 %v997
        %v1030 = vld [vmem:[#allocation5 + $0x3] sm:$0x1]
        %v1031 = vlaneseq
        %v1032 = vshrl.u32 %v1031, 7
        %v1033 = vsub.s32 0, %v1032
        %v1034 = vrot.slane %v1030, %v1033
        %v1035 = vmul.f32 %v998, %v1034
        %v1036 = vmul.f32 %v999, %v1034
        %v1037 = vmul.f32 %v1000, %v1034
        %v1038 = vmul.f32 %v1001, %v1034
        %v1039 = vmul.f32 %v1002, %v1034
        %v1040 = vmul.f32 %v1003, %v1034
        %v1041 = vmul.f32 %v1004, %v1034
        %v1042 = vmul.f32 %v1005, %v1034
        %v1043 = vmul.f32 %v1006, %v1034
        %v1044 = vmul.f32 %v1007, %v1034
        %v1045 = vmul.f32 %v1008, %v1034
        %v1046 = vmul.f32 %v1009, %v1034
        %v1047 = vmul.f32 %v1010, %v1034
        %v1048 = vmul.f32 %v1011, %v1034
        %v1049 = vmul.f32 %v1012, %v1034
        %v1050 = vmul.f32 %v1013, %v1034
        %v1051 = vmul.f32 %v1014, %v1034
        %v1052 = vmul.f32 %v1015, %v1034
        %v1053 = vmul.f32 %v1016, %v1034
        %v1054 = vmul.f32 %v1017, %v1034
        %v1055 = vmul.f32 %v1018, %v1034
        %v1056 = vmul.f32 %v1019, %v1034
        %v1057 = vmul.f32 %v1020, %v1034
        %v1058 = vmul.f32 %v1021, %v1034
        %v1059 = vmul.f32 %v1022, %v1034
        %v1060 = vmul.f32 %v1023, %v1034
        %v1061 = vmul.f32 %v1024, %v1034
        %v1062 = vmul.f32 %v1025, %v1034
        %v1063 = vmul.f32 %v1026, %v1034
        %v1064 = vmul.f32 %v1027, %v1034
        %v1065 = vmul.f32 %v1028, %v1034
        %v1066 = vmul.f32 %v1029, %v1034
        %v1067 = vadd.f32 %v933, %v1035
        %v1068 = vadd.f32 %v934, %v1036
        %v1069 = vadd.f32 %v935, %v1037
        %v1070 = vadd.f32 %v936, %v1038
        %v1071 = vadd.f32 %v937, %v1039
        %v1072 = vadd.f32 %v938, %v1040
        %v1073 = vadd.f32 %v939, %v1041
        %v1074 = vadd.f32 %v940, %v1042
        %v1075 = vadd.f32 %v941, %v1043
        %v1076 = vadd.f32 %v942, %v1044
        %v1077 = vadd.f32 %v943, %v1045
        %v1078 = vadd.f32 %v944, %v1046
        %v1079 = vadd.f32 %v945, %v1047
        %v1080 = vadd.f32 %v946, %v1048
        %v1081 = vadd.f32 %v947, %v1049
        %v1082 = vadd.f32 %v948, %v1050
        %v1083 = vadd.f32 %v949, %v1051
        %v1084 = vadd.f32 %v950, %v1052
        %v1085 = vadd.f32 %v951, %v1053
        %v1086 = vadd.f32 %v952, %v1054
        %v1087 = vadd.f32 %v953, %v1055
        %v1088 = vadd.f32 %v954, %v1056
        %v1089 = vadd.f32 %v955, %v1057
        %v1090 = vadd.f32 %v956, %v1058
        %v1091 = vadd.f32 %v957, %v1059
        %v1092 = vadd.f32 %v958, %v1060
        %v1093 = vadd.f32 %v959, %v1061
        %v1094 = vadd.f32 %v960, %v1062
        %v1095 = vadd.f32 %v961, %v1063
        %v1096 = vadd.f32 %v962, %v1064
        %v1097 = vadd.f32 %v963, %v1065
        %v1098 = vadd.f32 %v964, %v1066
        %v1099 = vld [vmem:[%s965 + $0x8] sm:$0x1]
        %v1100 = vld [vmem:[%s965 + $0x14] sm:$0x1]
        %v1101 = vld [vmem:[%s965 + $0x20] sm:$0x1]
        %v1102 = vld [vmem:[%s965 + $0x2c] sm:$0x1]
        %v1103 = vld [vmem:[%s965 + $0x38] sm:$0x1]
        %v1104 = vld [vmem:[%s965 + $0x44] sm:$0x1]
        %v1105 = vld [vmem:[%s965 + $0x50] sm:$0x1]
        %v1106 = vld [vmem:[%s965 + $0x5c] sm:$0x1]
        %v1107 = vld [vmem:[%s965 + $0x68] sm:$0x1]
        %v1108 = vld [vmem:[%s965 + $0x74] sm:$0x1]
        %v1109 = vld [vmem:[%s965 + $0x80] sm:$0x1]
        %v1110 = vld [vmem:[%s965 + $0x8c] sm:$0x1]
        %v1111 = vld [vmem:[%s965 + $0x98] sm:$0x1]
        %v1112 = vld [vmem:[%s965 + $0xa4] sm:$0x1]
        %v1113 = vld [vmem:[%s965 + $0xb0] sm:$0x1]
        %v1114 = vld [vmem:[%s965 + $0xbc] sm:$0x1]
        %v1115 = vunpack.c.l.bf16 %v1099
        %v1116 = vunpack.c.l.bf16 %v1100
        %v1117 = vunpack.c.l.bf16 %v1101
        %v1118 = vunpack.c.l.bf16 %v1102
        %v1119 = vunpack.c.l.bf16 %v1103
        %v1120 = vunpack.c.l.bf16 %v1104
        %v1121 = vunpack.c.l.bf16 %v1105
        %v1122 = vunpack.c.l.bf16 %v1106
        %v1123 = vunpack.c.l.bf16 %v1107
        %v1124 = vunpack.c.l.bf16 %v1108
        %v1125 = vunpack.c.l.bf16 %v1109
        %v1126 = vunpack.c.l.bf16 %v1110
        %v1127 = vunpack.c.l.bf16 %v1111
        %v1128 = vunpack.c.l.bf16 %v1112
        %v1129 = vunpack.c.l.bf16 %v1113
        %v1130 = vunpack.c.l.bf16 %v1114
        %v1131 = vld [vmem:[#allocation5 + $0x4] sm:$0x1]
        %v1132 = vlaneseq
        %v1133 = vshrl.u32 %v1132, 7
        %v1134 = vsub.s32 0, %v1133
        %v1135 = vrot.slane %v1131, %v1134
        %v1136 = vmul.f32 %v998, %v1135
        %v1137 = vmul.f32 %v999, %v1135
        %v1138 = vmul.f32 %v1115, %v1135
        %v1139 = vmul.f32 %v1000, %v1135
        %v1140 = vmul.f32 %v1001, %v1135
        %v1141 = vmul.f32 %v1116, %v1135
        %v1142 = vmul.f32 %v1002, %v1135
        %v1143 = vmul.f32 %v1003, %v1135
        %v1144 = vmul.f32 %v1117, %v1135
        %v1145 = vmul.f32 %v1004, %v1135
        %v1146 = vmul.f32 %v1005, %v1135
        %v1147 = vmul.f32 %v1118, %v1135
        %v1148 = vmul.f32 %v1006, %v1135
        %v1149 = vmul.f32 %v1007, %v1135
        %v1150 = vmul.f32 %v1119, %v1135
        %v1151 = vmul.f32 %v1008, %v1135
        %v1152 = vmul.f32 %v1009, %v1135
        %v1153 = vmul.f32 %v1120, %v1135
        %v1154 = vmul.f32 %v1010, %v1135
        %v1155 = vmul.f32 %v1011, %v1135
        %v1156 = vmul.f32 %v1121, %v1135
        %v1157 = vmul.f32 %v1012, %v1135
        %v1158 = vmul.f32 %v1013, %v1135
        %v1159 = vmul.f32 %v1122, %v1135
        %v1160 = vmul.f32 %v1014, %v1135
        %v1161 = vmul.f32 %v1015, %v1135
        %v1162 = vmul.f32 %v1123, %v1135
        %v1163 = vmul.f32 %v1016, %v1135
        %v1164 = vmul.f32 %v1017, %v1135
        %v1165 = vmul.f32 %v1124, %v1135
        %v1166 = vmul.f32 %v1018, %v1135
        %v1167 = vmul.f32 %v1019, %v1135
        %v1168 = vmul.f32 %v1125, %v1135
        %v1169 = vmul.f32 %v1020, %v1135
        %v1170 = vmul.f32 %v1021, %v1135
        %v1171 = vmul.f32 %v1126, %v1135
        %v1172 = vmul.f32 %v1022, %v1135
        %v1173 = vmul.f32 %v1023, %v1135
        %v1174 = vmul.f32 %v1127, %v1135
        %v1175 = vmul.f32 %v1024, %v1135
        %v1176 = vmul.f32 %v1025, %v1135
        %v1177 = vmul.f32 %v1128, %v1135
        %v1178 = vmul.f32 %v1026, %v1135
        %v1179 = vmul.f32 %v1027, %v1135
        %v1180 = vmul.f32 %v1129, %v1135
        %v1181 = vmul.f32 %v1028, %v1135
        %v1182 = vmul.f32 %v1029, %v1135
        %v1183 = vmul.f32 %v1130, %v1135
        %v1232 = vrot.slane %v1136, 1
        %v1233 = vrot.slane %v1137, 1
        %v1234 = vsel %vm542, %v1232, %v1233
        %v1235 = vrot.slane %v1138, 1
        %v1236 = vsel %vm542, %v1233, %v1235
        %v1237 = vrot.slane %v1139, 1
        %v1238 = vrot.slane %v1140, 1
        %v1239 = vsel %vm542, %v1237, %v1238
        %v1240 = vrot.slane %v1141, 1
        %v1241 = vsel %vm542, %v1238, %v1240
        %v1242 = vrot.slane %v1142, 1
        %v1243 = vrot.slane %v1143, 1
        %v1244 = vsel %vm542, %v1242, %v1243
        %v1245 = vrot.slane %v1144, 1
        %v1246 = vsel %vm542, %v1243, %v1245
        %v1247 = vrot.slane %v1145, 1
        %v1248 = vrot.slane %v1146, 1
        %v1249 = vsel %vm542, %v1247, %v1248
        %v1250 = vrot.slane %v1147, 1
        %v1251 = vsel %vm542, %v1248, %v1250
        %v1252 = vrot.slane %v1148, 1
        %v1253 = vrot.slane %v1149, 1
        %v1254 = vsel %vm542, %v1252, %v1253
        %v1255 = vrot.slane %v1150, 1
        %v1256 = vsel %vm542, %v1253, %v1255
        %v1257 = vrot.slane %v1151, 1
        %v1258 = vrot.slane %v1152, 1
        %v1259 = vsel %vm542, %v1257, %v1258
        %v1260 = vrot.slane %v1153, 1
        %v1261 = vsel %vm542, %v1258, %v1260
        %v1262 = vrot.slane %v1154, 1
        %v1263 = vrot.slane %v1155, 1
        %v1264 = vsel %vm542, %v1262, %v1263
        %v1265 = vrot.slane %v1156, 1
        %v1266 = vsel %vm542, %v1263, %v1265
        %v1267 = vrot.slane %v1157, 1
        %v1268 = vrot.slane %v1158, 1
        %v1269 = vsel %vm542, %v1267, %v1268
        %v1270 = vrot.slane %v1159, 1
        %v1271 = vsel %vm542, %v1268, %v1270
        %v1272 = vrot.slane %v1160, 1
        %v1273 = vrot.slane %v1161, 1
        %v1274 = vsel %vm542, %v1272, %v1273
        %v1275 = vrot.slane %v1162, 1
        %v1276 = vsel %vm542, %v1273, %v1275
        %v1277 = vrot.slane %v1163, 1
        %v1278 = vrot.slane %v1164, 1
        %v1279 = vsel %vm542, %v1277, %v1278
        %v1280 = vrot.slane %v1165, 1
        %v1281 = vsel %vm542, %v1278, %v1280
        %v1282 = vrot.slane %v1166, 1
        %v1283 = vrot.slane %v1167, 1
        %v1284 = vsel %vm542, %v1282, %v1283
        %v1285 = vrot.slane %v1168, 1
        %v1286 = vsel %vm542, %v1283, %v1285
        %v1287 = vrot.slane %v1169, 1
        %v1288 = vrot.slane %v1170, 1
        %v1289 = vsel %vm542, %v1287, %v1288
        %v1290 = vrot.slane %v1171, 1
        %v1291 = vsel %vm542, %v1288, %v1290
        %v1292 = vrot.slane %v1172, 1
        %v1293 = vrot.slane %v1173, 1
        %v1294 = vsel %vm542, %v1292, %v1293
        %v1295 = vrot.slane %v1174, 1
        %v1296 = vsel %vm542, %v1293, %v1295
        %v1297 = vrot.slane %v1175, 1
        %v1298 = vrot.slane %v1176, 1
        %v1299 = vsel %vm542, %v1297, %v1298
        %v1300 = vrot.slane %v1177, 1
        %v1301 = vsel %vm542, %v1298, %v1300
        %v1302 = vrot.slane %v1178, 1
        %v1303 = vrot.slane %v1179, 1
        %v1304 = vsel %vm542, %v1302, %v1303
        %v1305 = vrot.slane %v1180, 1
        %v1306 = vsel %vm542, %v1303, %v1305
        %v1307 = vrot.slane %v1181, 1
        %v1308 = vrot.slane %v1182, 1
        %v1309 = vsel %vm542, %v1307, %v1308
        %v1310 = vrot.slane %v1183, 1
        %v1311 = vsel %vm542, %v1308, %v1310
        %v1344 = vadd.f32 %v1067, %v1234
        %v1345 = vadd.f32 %v1068, %v1236
        %v1346 = vadd.f32 %v1069, %v1239
        %v1347 = vadd.f32 %v1070, %v1241
        %v1348 = vadd.f32 %v1071, %v1244
        %v1349 = vadd.f32 %v1072, %v1246
        %v1350 = vadd.f32 %v1073, %v1249
        %v1351 = vadd.f32 %v1074, %v1251
        %v1352 = vadd.f32 %v1075, %v1254
        %v1353 = vadd.f32 %v1076, %v1256
        %v1354 = vadd.f32 %v1077, %v1259
        %v1355 = vadd.f32 %v1078, %v1261
        %v1356 = vadd.f32 %v1079, %v1264
        %v1357 = vadd.f32 %v1080, %v1266
        %v1358 = vadd.f32 %v1081, %v1269
        %v1359 = vadd.f32 %v1082, %v1271
        %v1360 = vadd.f32 %v1083, %v1274
        %v1361 = vadd.f32 %v1084, %v1276
        %v1362 = vadd.f32 %v1085, %v1279
        %v1363 = vadd.f32 %v1086, %v1281
        %v1364 = vadd.f32 %v1087, %v1284
        %v1365 = vadd.f32 %v1088, %v1286
        %v1366 = vadd.f32 %v1089, %v1289
        %v1367 = vadd.f32 %v1090, %v1291
        %v1368 = vadd.f32 %v1091, %v1294
        %v1369 = vadd.f32 %v1092, %v1296
        %v1370 = vadd.f32 %v1093, %v1299
        %v1371 = vadd.f32 %v1094, %v1301
        %v1372 = vadd.f32 %v1095, %v1304
        %v1373 = vadd.f32 %v1096, %v1306
        %v1374 = vadd.f32 %v1097, %v1309
        %v1375 = vadd.f32 %v1098, %v1311
        %v1376 = vld [vmem:[%s965] sm:$0xe]
        %v1377 = vld [vmem:[%s965 + $0xc] sm:$0xe]
        %v1378 = vld [vmem:[%s965 + $0x18] sm:$0xe]
        %v1379 = vld [vmem:[%s965 + $0x24] sm:$0xe]
        %v1380 = vld [vmem:[%s965 + $0x30] sm:$0xe]
        %v1381 = vld [vmem:[%s965 + $0x3c] sm:$0xe]
        %v1382 = vld [vmem:[%s965 + $0x48] sm:$0xe]
        %v1383 = vld [vmem:[%s965 + $0x54] sm:$0xe]
        %v1384 = vld [vmem:[%s965 + $0x60] sm:$0xe]
        %v1385 = vld [vmem:[%s965 + $0x6c] sm:$0xe]
        %v1386 = vld [vmem:[%s965 + $0x78] sm:$0xe]
        %v1387 = vld [vmem:[%s965 + $0x84] sm:$0xe]
        %v1388 = vld [vmem:[%s965 + $0x90] sm:$0xe]
        %v1389 = vld [vmem:[%s965 + $0x9c] sm:$0xe]
        %v1390 = vld [vmem:[%s965 + $0xa8] sm:$0xe]
        %v1391 = vld [vmem:[%s965 + $0xb4] sm:$0xe]
        %v1392 = vunpack.c.l.bf16 %v1376
        %v1393 = vunpack.c.l.bf16 %v1377
        %v1394 = vunpack.c.l.bf16 %v1378
        %v1395 = vunpack.c.l.bf16 %v1379
        %v1396 = vunpack.c.l.bf16 %v1380
        %v1397 = vunpack.c.l.bf16 %v1381
        %v1398 = vunpack.c.l.bf16 %v1382
        %v1399 = vunpack.c.l.bf16 %v1383
        %v1400 = vunpack.c.l.bf16 %v1384
        %v1401 = vunpack.c.l.bf16 %v1385
        %v1402 = vunpack.c.l.bf16 %v1386
        %v1403 = vunpack.c.l.bf16 %v1387
        %v1404 = vunpack.c.l.bf16 %v1388
        %v1405 = vunpack.c.l.bf16 %v1389
        %v1406 = vunpack.c.l.bf16 %v1390
        %v1407 = vunpack.c.l.bf16 %v1391
        %v1408 = vld [vmem:[#allocation5 + $0x5] sm:$0x1]
        %v1409 = vlaneseq
        %v1410 = vshrl.u32 %v1409, 7
        %v1411 = vsub.s32 0, %v1410
        %v1412 = vrot.slane %v1408, %v1411
        %v1413 = vmul.f32 %v1392, %v1412
        %v1414 = vmul.f32 %v999, %v1412
        %v1415 = vmul.f32 %v1115, %v1412
        %v1416 = vmul.f32 %v1393, %v1412
        %v1417 = vmul.f32 %v1001, %v1412
        %v1418 = vmul.f32 %v1116, %v1412
        %v1419 = vmul.f32 %v1394, %v1412
        %v1420 = vmul.f32 %v1003, %v1412
        %v1421 = vmul.f32 %v1117, %v1412
        %v1422 = vmul.f32 %v1395, %v1412
        %v1423 = vmul.f32 %v1005, %v1412
        %v1424 = vmul.f32 %v1118, %v1412
        %v1425 = vmul.f32 %v1396, %v1412
        %v1426 = vmul.f32 %v1007, %v1412
        %v1427 = vmul.f32 %v1119, %v1412
        %v1428 = vmul.f32 %v1397, %v1412
        %v1429 = vmul.f32 %v1009, %v1412
        %v1430 = vmul.f32 %v1120, %v1412
        %v1431 = vmul.f32 %v1398, %v1412
        %v1432 = vmul.f32 %v1011, %v1412
        %v1433 = vmul.f32 %v1121, %v1412
        %v1434 = vmul.f32 %v1399, %v1412
        %v1435 = vmul.f32 %v1013, %v1412
        %v1436 = vmul.f32 %v1122, %v1412
        %v1437 = vmul.f32 %v1400, %v1412
        %v1438 = vmul.f32 %v1015, %v1412
        %v1439 = vmul.f32 %v1123, %v1412
        %v1440 = vmul.f32 %v1401, %v1412
        %v1441 = vmul.f32 %v1017, %v1412
        %v1442 = vmul.f32 %v1124, %v1412
        %v1443 = vmul.f32 %v1402, %v1412
        %v1444 = vmul.f32 %v1019, %v1412
        %v1445 = vmul.f32 %v1125, %v1412
        %v1446 = vmul.f32 %v1403, %v1412
        %v1447 = vmul.f32 %v1021, %v1412
        %v1448 = vmul.f32 %v1126, %v1412
        %v1449 = vmul.f32 %v1404, %v1412
        %v1450 = vmul.f32 %v1023, %v1412
        %v1451 = vmul.f32 %v1127, %v1412
        %v1452 = vmul.f32 %v1405, %v1412
        %v1453 = vmul.f32 %v1025, %v1412
        %v1454 = vmul.f32 %v1128, %v1412
        %v1455 = vmul.f32 %v1406, %v1412
        %v1456 = vmul.f32 %v1027, %v1412
        %v1457 = vmul.f32 %v1129, %v1412
        %v1458 = vmul.f32 %v1407, %v1412
        %v1459 = vmul.f32 %v1029, %v1412
        %v1460 = vmul.f32 %v1130, %v1412
        %v1509 = vrot.slane %v1413, 2
        %v1510 = vrot.slane %v1414, 2
        %v1511 = vsel %vm820, %v1509, %v1510
        %v1512 = vrot.slane %v1415, 2
        %v1513 = vsel %vm820, %v1510, %v1512
        %v1514 = vrot.slane %v1416, 2
        %v1515 = vrot.slane %v1417, 2
        %v1516 = vsel %vm820, %v1514, %v1515
        %v1517 = vrot.slane %v1418, 2
        %v1518 = vsel %vm820, %v1515, %v1517
        %v1519 = vrot.slane %v1419, 2
        %v1520 = vrot.slane %v1420, 2
        %v1521 = vsel %vm820, %v1519, %v1520
        %v1522 = vrot.slane %v1421, 2
        %v1523 = vsel %vm820, %v1520, %v1522
        %v1524 = vrot.slane %v1422, 2
        %v1525 = vrot.slane %v1423, 2
        %v1526 = vsel %vm820, %v1524, %v1525
        %v1527 = vrot.slane %v1424, 2
        %v1528 = vsel %vm820, %v1525, %v1527
        %v1529 = vrot.slane %v1425, 2
        %v1530 = vrot.slane %v1426, 2
        %v1531 = vsel %vm820, %v1529, %v1530
        %v1532 = vrot.slane %v1427, 2
        %v1533 = vsel %vm820, %v1530, %v1532
        %v1534 = vrot.slane %v1428, 2
        %v1535 = vrot.slane %v1429, 2
        %v1536 = vsel %vm820, %v1534, %v1535
        %v1537 = vrot.slane %v1430, 2
        %v1538 = vsel %vm820, %v1535, %v1537
        %v1539 = vrot.slane %v1431, 2
        %v1540 = vrot.slane %v1432, 2
        %v1541 = vsel %vm820, %v1539, %v1540
        %v1542 = vrot.slane %v1433, 2
        %v1543 = vsel %vm820, %v1540, %v1542
        %v1544 = vrot.slane %v1434, 2
        %v1545 = vrot.slane %v1435, 2
        %v1546 = vsel %vm820, %v1544, %v1545
        %v1547 = vrot.slane %v1436, 2
        %v1548 = vsel %vm820, %v1545, %v1547
        %v1549 = vrot.slane %v1437, 2
        %v1550 = vrot.slane %v1438, 2
        %v1551 = vsel %vm820, %v1549, %v1550
        %v1552 = vrot.slane %v1439, 2
        %v1553 = vsel %vm820, %v1550, %v1552
        %v1554 = vrot.slane %v1440, 2
        %v1555 = vrot.slane %v1441, 2
        %v1556 = vsel %vm820, %v1554, %v1555
        %v1557 = vrot.slane %v1442, 2
        %v1558 = vsel %vm820, %v1555, %v1557
        %v1559 = vrot.slane %v1443, 2
        %v1560 = vrot.slane %v1444, 2
        %v1561 = vsel %vm820, %v1559, %v1560
        %v1562 = vrot.slane %v1445, 2
        %v1563 = vsel %vm820, %v1560, %v1562
        %v1564 = vrot.slane %v1446, 2
        %v1565 = vrot.slane %v1447, 2
        %v1566 = vsel %vm820, %v1564, %v1565
        %v1567 = vrot.slane %v1448, 2
        %v1568 = vsel %vm820, %v1565, %v1567
        %v1569 = vrot.slane %v1449, 2
        %v1570 = vrot.slane %v1450, 2
        %v1571 = vsel %vm820, %v1569, %v1570
        %v1572 = vrot.slane %v1451, 2
        %v1573 = vsel %vm820, %v1570, %v1572
        %v1574 = vrot.slane %v1452, 2
        %v1575 = vrot.slane %v1453, 2
        %v1576 = vsel %vm820, %v1574, %v1575
        %v1577 = vrot.slane %v1454, 2
        %v1578 = vsel %vm820, %v1575, %v1577
        %v1579 = vrot.slane %v1455, 2
        %v1580 = vrot.slane %v1456, 2
        %v1581 = vsel %vm820, %v1579, %v1580
        %v1582 = vrot.slane %v1457, 2
        %v1583 = vsel %vm820, %v1580, %v1582
        %v1584 = vrot.slane %v1458, 2
        %v1585 = vrot.slane %v1459, 2
        %v1586 = vsel %vm820, %v1584, %v1585
        %v1587 = vrot.slane %v1460, 2
        %v1588 = vsel %vm820, %v1585, %v1587
        %v1621 = vadd.f32 %v1344, %v1511
        %v1622 = vadd.f32 %v1345, %v1513
        %v1623 = vadd.f32 %v1346, %v1516
        %v1624 = vadd.f32 %v1347, %v1518
        %v1625 = vadd.f32 %v1348, %v1521
        %v1626 = vadd.f32 %v1349, %v1523
        %v1627 = vadd.f32 %v1350, %v1526
        %v1628 = vadd.f32 %v1351, %v1528
        %v1629 = vadd.f32 %v1352, %v1531
        %v1630 = vadd.f32 %v1353, %v1533
        %v1631 = vadd.f32 %v1354, %v1536
        %v1632 = vadd.f32 %v1355, %v1538
        %v1633 = vadd.f32 %v1356, %v1541
        %v1634 = vadd.f32 %v1357, %v1543
        %v1635 = vadd.f32 %v1358, %v1546
        %v1636 = vadd.f32 %v1359, %v1548
        %v1637 = vadd.f32 %v1360, %v1551
        %v1638 = vadd.f32 %v1361, %v1553
        %v1639 = vadd.f32 %v1362, %v1556
        %v1640 = vadd.f32 %v1363, %v1558
        %v1641 = vadd.f32 %v1364, %v1561
        %v1642 = vadd.f32 %v1365, %v1563
        %v1643 = vadd.f32 %v1366, %v1566
        %v1644 = vadd.f32 %v1367, %v1568
        %v1645 = vadd.f32 %v1368, %v1571
        %v1646 = vadd.f32 %v1369, %v1573
        %v1647 = vadd.f32 %v1370, %v1576
        %v1648 = vadd.f32 %v1371, %v1578
        %v1649 = vadd.f32 %v1372, %v1581
        %v1650 = vadd.f32 %v1373, %v1583
        %v1651 = vadd.f32 %v1374, %v1586
        %v1652 = vadd.f32 %v1375, %v1588
        %s1653 = scalar_lea.vmem %s242, 24 [#allocation2]
        %v1654 = vld [vmem:[%s1653] sm:$0xf]
        %v1655 = vld [vmem:[%s1653 + $0x4] sm:$0xf]
        %v1656 = vld [vmem:[%s1653 + $0xc] sm:$0xf]
        %v1657 = vld [vmem:[%s1653 + $0x10] sm:$0xf]
        %v1658 = vld [vmem:[%s1653 + $0x18] sm:$0xf]
        %v1659 = vld [vmem:[%s1653 + $0x1c] sm:$0xf]
        %v1660 = vld [vmem:[%s1653 + $0x24] sm:$0xf]
        %v1661 = vld [vmem:[%s1653 + $0x28] sm:$0xf]
        %v1662 = vld [vmem:[%s1653 + $0x30] sm:$0xf]
        %v1663 = vld [vmem:[%s1653 + $0x34] sm:$0xf]
        %v1664 = vld [vmem:[%s1653 + $0x3c] sm:$0xf]
        %v1665 = vld [vmem:[%s1653 + $0x40] sm:$0xf]
        %v1666 = vld [vmem:[%s1653 + $0x48] sm:$0xf]
        %v1667 = vld [vmem:[%s1653 + $0x4c] sm:$0xf]
        %v1668 = vld [vmem:[%s1653 + $0x54] sm:$0xf]
        %v1669 = vld [vmem:[%s1653 + $0x58] sm:$0xf]
        %v1670 = vld [vmem:[%s1653 + $0x60] sm:$0xf]
        %v1671 = vld [vmem:[%s1653 + $0x64] sm:$0xf]
        %v1672 = vld [vmem:[%s1653 + $0x6c] sm:$0xf]
        %v1673 = vld [vmem:[%s1653 + $0x70] sm:$0xf]
        %v1674 = vld [vmem:[%s1653 + $0x78] sm:$0xf]
        %v1675 = vld [vmem:[%s1653 + $0x7c] sm:$0xf]
        %v1676 = vld [vmem:[%s1653 + $0x84] sm:$0xf]
        %v1677 = vld [vmem:[%s1653 + $0x88] sm:$0xf]
        %v1678 = vld [vmem:[%s1653 + $0x90] sm:$0xf]
        %v1679 = vld [vmem:[%s1653 + $0x94] sm:$0xf]
        %v1680 = vld [vmem:[%s1653 + $0x9c] sm:$0xf]
        %v1681 = vld [vmem:[%s1653 + $0xa0] sm:$0xf]
        %v1682 = vld [vmem:[%s1653 + $0xa8] sm:$0xf]
        %v1683 = vld [vmem:[%s1653 + $0xac] sm:$0xf]
        %v1684 = vld [vmem:[%s1653 + $0xb4] sm:$0xf]
        %v1685 = vld [vmem:[%s1653 + $0xb8] sm:$0xf]
        %v1686 = vunpack.c.l.bf16 %v1654
        %v1687 = vunpack.c.l.bf16 %v1655
        %v1688 = vunpack.c.l.bf16 %v1656
        %v1689 = vunpack.c.l.bf16 %v1657
        %v1690 = vunpack.c.l.bf16 %v1658
        %v1691 = vunpack.c.l.bf16 %v1659
        %v1692 = vunpack.c.l.bf16 %v1660
        %v1693 = vunpack.c.l.bf16 %v1661
        %v1694 = vunpack.c.l.bf16 %v1662
        %v1695 = vunpack.c.l.bf16 %v1663
        %v1696 = vunpack.c.l.bf16 %v1664
        %v1697 = vunpack.c.l.bf16 %v1665
        %v1698 = vunpack.c.l.bf16 %v1666
        %v1699 = vunpack.c.l.bf16 %v1667
        %v1700 = vunpack.c.l.bf16 %v1668
        %v1701 = vunpack.c.l.bf16 %v1669
        %v1702 = vunpack.c.l.bf16 %v1670
        %v1703 = vunpack.c.l.bf16 %v1671
        %v1704 = vunpack.c.l.bf16 %v1672
        %v1705 = vunpack.c.l.bf16 %v1673
        %v1706 = vunpack.c.l.bf16 %v1674
        %v1707 = vunpack.c.l.bf16 %v1675
        %v1708 = vunpack.c.l.bf16 %v1676
        %v1709 = vunpack.c.l.bf16 %v1677
        %v1710 = vunpack.c.l.bf16 %v1678
        %v1711 = vunpack.c.l.bf16 %v1679
        %v1712 = vunpack.c.l.bf16 %v1680
        %v1713 = vunpack.c.l.bf16 %v1681
        %v1714 = vunpack.c.l.bf16 %v1682
        %v1715 = vunpack.c.l.bf16 %v1683
        %v1716 = vunpack.c.l.bf16 %v1684
        %v1717 = vunpack.c.l.bf16 %v1685
        %v1718 = vld [vmem:[#allocation5 + $0x6] sm:$0x1]
        %v1719 = vlaneseq
        %v1720 = vshrl.u32 %v1719, 7
        %v1721 = vsub.s32 0, %v1720
        %v1722 = vrot.slane %v1718, %v1721
        %v1723 = vmul.f32 %v1686, %v1722
        %v1724 = vmul.f32 %v1687, %v1722
        %v1725 = vmul.f32 %v1688, %v1722
        %v1726 = vmul.f32 %v1689, %v1722
        %v1727 = vmul.f32 %v1690, %v1722
        %v1728 = vmul.f32 %v1691, %v1722
        %v1729 = vmul.f32 %v1692, %v1722
        %v1730 = vmul.f32 %v1693, %v1722
        %v1731 = vmul.f32 %v1694, %v1722
        %v1732 = vmul.f32 %v1695, %v1722
        %v1733 = vmul.f32 %v1696, %v1722
        %v1734 = vmul.f32 %v1697, %v1722
        %v1735 = vmul.f32 %v1698, %v1722
        %v1736 = vmul.f32 %v1699, %v1722
        %v1737 = vmul.f32 %v1700, %v1722
        %v1738 = vmul.f32 %v1701, %v1722
        %v1739 = vmul.f32 %v1702, %v1722
        %v1740 = vmul.f32 %v1703, %v1722
        %v1741 = vmul.f32 %v1704, %v1722
        %v1742 = vmul.f32 %v1705, %v1722
        %v1743 = vmul.f32 %v1706, %v1722
        %v1744 = vmul.f32 %v1707, %v1722
        %v1745 = vmul.f32 %v1708, %v1722
        %v1746 = vmul.f32 %v1709, %v1722
        %v1747 = vmul.f32 %v1710, %v1722
        %v1748 = vmul.f32 %v1711, %v1722
        %v1749 = vmul.f32 %v1712, %v1722
        %v1750 = vmul.f32 %v1713, %v1722
        %v1751 = vmul.f32 %v1714, %v1722
        %v1752 = vmul.f32 %v1715, %v1722
        %v1753 = vmul.f32 %v1716, %v1722
        %v1754 = vmul.f32 %v1717, %v1722
        %v1755 = vadd.f32 %v1621, %v1723
        %v1756 = vadd.f32 %v1622, %v1724
        %v1757 = vadd.f32 %v1623, %v1725
        %v1758 = vadd.f32 %v1624, %v1726
        %v1759 = vadd.f32 %v1625, %v1727
        %v1760 = vadd.f32 %v1626, %v1728
        %v1761 = vadd.f32 %v1627, %v1729
        %v1762 = vadd.f32 %v1628, %v1730
        %v1763 = vadd.f32 %v1629, %v1731
        %v1764 = vadd.f32 %v1630, %v1732
        %v1765 = vadd.f32 %v1631, %v1733
        %v1766 = vadd.f32 %v1632, %v1734
        %v1767 = vadd.f32 %v1633, %v1735
        %v1768 = vadd.f32 %v1634, %v1736
        %v1769 = vadd.f32 %v1635, %v1737
        %v1770 = vadd.f32 %v1636, %v1738
        %v1771 = vadd.f32 %v1637, %v1739
        %v1772 = vadd.f32 %v1638, %v1740
        %v1773 = vadd.f32 %v1639, %v1741
        %v1774 = vadd.f32 %v1640, %v1742
        %v1775 = vadd.f32 %v1641, %v1743
        %v1776 = vadd.f32 %v1642, %v1744
        %v1777 = vadd.f32 %v1643, %v1745
        %v1778 = vadd.f32 %v1644, %v1746
        %v1779 = vadd.f32 %v1645, %v1747
        %v1780 = vadd.f32 %v1646, %v1748
        %v1781 = vadd.f32 %v1647, %v1749
        %v1782 = vadd.f32 %v1648, %v1750
        %v1783 = vadd.f32 %v1649, %v1751
        %v1784 = vadd.f32 %v1650, %v1752
        %v1785 = vadd.f32 %v1651, %v1753
        %v1786 = vadd.f32 %v1652, %v1754
        %v1787 = vld [vmem:[%s1653 + $0x8] sm:$0x1]
        %v1788 = vld [vmem:[%s1653 + $0x14] sm:$0x1]
        %v1789 = vld [vmem:[%s1653 + $0x20] sm:$0x1]
        %v1790 = vld [vmem:[%s1653 + $0x2c] sm:$0x1]
        %v1791 = vld [vmem:[%s1653 + $0x38] sm:$0x1]
        %v1792 = vld [vmem:[%s1653 + $0x44] sm:$0x1]
        %v1793 = vld [vmem:[%s1653 + $0x50] sm:$0x1]
        %v1794 = vld [vmem:[%s1653 + $0x5c] sm:$0x1]
        %v1795 = vld [vmem:[%s1653 + $0x68] sm:$0x1]
        %v1796 = vld [vmem:[%s1653 + $0x74] sm:$0x1]
        %v1797 = vld [vmem:[%s1653 + $0x80] sm:$0x1]
        %v1798 = vld [vmem:[%s1653 + $0x8c] sm:$0x1]
        %v1799 = vld [vmem:[%s1653 + $0x98] sm:$0x1]
        %v1800 = vld [vmem:[%s1653 + $0xa4] sm:$0x1]
        %v1801 = vld [vmem:[%s1653 + $0xb0] sm:$0x1]
        %v1802 = vld [vmem:[%s1653 + $0xbc] sm:$0x1]
        %v1803 = vunpack.c.l.bf16 %v1787
        %v1804 = vunpack.c.l.bf16 %v1788
        %v1805 = vunpack.c.l.bf16 %v1789
        %v1806 = vunpack.c.l.bf16 %v1790
        %v1807 = vunpack.c.l.bf16 %v1791
        %v1808 = vunpack.c.l.bf16 %v1792
        %v1809 = vunpack.c.l.bf16 %v1793
        %v1810 = vunpack.c.l.bf16 %v1794
        %v1811 = vunpack.c.l.bf16 %v1795
        %v1812 = vunpack.c.l.bf16 %v1796
        %v1813 = vunpack.c.l.bf16 %v1797
        %v1814 = vunpack.c.l.bf16 %v1798
        %v1815 = vunpack.c.l.bf16 %v1799
        %v1816 = vunpack.c.l.bf16 %v1800
        %v1817 = vunpack.c.l.bf16 %v1801
        %v1818 = vunpack.c.l.bf16 %v1802
        %v1819 = vld [vmem:[#allocation5 + $0x7] sm:$0x1]
        %v1820 = vlaneseq
        %v1821 = vshrl.u32 %v1820, 7
        %v1822 = vsub.s32 0, %v1821
        %v1823 = vrot.slane %v1819, %v1822
        %v1824 = vmul.f32 %v1686, %v1823
        %v1825 = vmul.f32 %v1687, %v1823
        %v1826 = vmul.f32 %v1803, %v1823
        %v1827 = vmul.f32 %v1688, %v1823
        %v1828 = vmul.f32 %v1689, %v1823
        %v1829 = vmul.f32 %v1804, %v1823
        %v1830 = vmul.f32 %v1690, %v1823
        %v1831 = vmul.f32 %v1691, %v1823
        %v1832 = vmul.f32 %v1805, %v1823
        %v1833 = vmul.f32 %v1692, %v1823
        %v1834 = vmul.f32 %v1693, %v1823
        %v1835 = vmul.f32 %v1806, %v1823
        %v1836 = vmul.f32 %v1694, %v1823
        %v1837 = vmul.f32 %v1695, %v1823
        %v1838 = vmul.f32 %v1807, %v1823
        %v1839 = vmul.f32 %v1696, %v1823
        %v1840 = vmul.f32 %v1697, %v1823
        %v1841 = vmul.f32 %v1808, %v1823
        %v1842 = vmul.f32 %v1698, %v1823
        %v1843 = vmul.f32 %v1699, %v1823
        %v1844 = vmul.f32 %v1809, %v1823
        %v1845 = vmul.f32 %v1700, %v1823
        %v1846 = vmul.f32 %v1701, %v1823
        %v1847 = vmul.f32 %v1810, %v1823
        %v1848 = vmul.f32 %v1702, %v1823
        %v1849 = vmul.f32 %v1703, %v1823
        %v1850 = vmul.f32 %v1811, %v1823
        %v1851 = vmul.f32 %v1704, %v1823
        %v1852 = vmul.f32 %v1705, %v1823
        %v1853 = vmul.f32 %v1812, %v1823
        %v1854 = vmul.f32 %v1706, %v1823
        %v1855 = vmul.f32 %v1707, %v1823
        %v1856 = vmul.f32 %v1813, %v1823
        %v1857 = vmul.f32 %v1708, %v1823
        %v1858 = vmul.f32 %v1709, %v1823
        %v1859 = vmul.f32 %v1814, %v1823
        %v1860 = vmul.f32 %v1710, %v1823
        %v1861 = vmul.f32 %v1711, %v1823
        %v1862 = vmul.f32 %v1815, %v1823
        %v1863 = vmul.f32 %v1712, %v1823
        %v1864 = vmul.f32 %v1713, %v1823
        %v1865 = vmul.f32 %v1816, %v1823
        %v1866 = vmul.f32 %v1714, %v1823
        %v1867 = vmul.f32 %v1715, %v1823
        %v1868 = vmul.f32 %v1817, %v1823
        %v1869 = vmul.f32 %v1716, %v1823
        %v1870 = vmul.f32 %v1717, %v1823
        %v1871 = vmul.f32 %v1818, %v1823
        %v1920 = vrot.slane %v1824, 1
        %v1921 = vrot.slane %v1825, 1
        %v1922 = vsel %vm542, %v1920, %v1921
        %v1923 = vrot.slane %v1826, 1
        %v1924 = vsel %vm542, %v1921, %v1923
        %v1925 = vrot.slane %v1827, 1
        %v1926 = vrot.slane %v1828, 1
        %v1927 = vsel %vm542, %v1925, %v1926
        %v1928 = vrot.slane %v1829, 1
        %v1929 = vsel %vm542, %v1926, %v1928
        %v1930 = vrot.slane %v1830, 1
        %v1931 = vrot.slane %v1831, 1
        %v1932 = vsel %vm542, %v1930, %v1931
        %v1933 = vrot.slane %v1832, 1
        %v1934 = vsel %vm542, %v1931, %v1933
        %v1935 = vrot.slane %v1833, 1
        %v1936 = vrot.slane %v1834, 1
        %v1937 = vsel %vm542, %v1935, %v1936
        %v1938 = vrot.slane %v1835, 1
        %v1939 = vsel %vm542, %v1936, %v1938
        %v1940 = vrot.slane %v1836, 1
        %v1941 = vrot.slane %v1837, 1
        %v1942 = vsel %vm542, %v1940, %v1941
        %v1943 = vrot.slane %v1838, 1
        %v1944 = vsel %vm542, %v1941, %v1943
        %v1945 = vrot.slane %v1839, 1
        %v1946 = vrot.slane %v1840, 1
        %v1947 = vsel %vm542, %v1945, %v1946
        %v1948 = vrot.slane %v1841, 1
        %v1949 = vsel %vm542, %v1946, %v1948
        %v1950 = vrot.slane %v1842, 1
        %v1951 = vrot.slane %v1843, 1
        %v1952 = vsel %vm542, %v1950, %v1951
        %v1953 = vrot.slane %v1844, 1
        %v1954 = vsel %vm542, %v1951, %v1953
        %v1955 = vrot.slane %v1845, 1
        %v1956 = vrot.slane %v1846, 1
        %v1957 = vsel %vm542, %v1955, %v1956
        %v1958 = vrot.slane %v1847, 1
        %v1959 = vsel %vm542, %v1956, %v1958
        %v1960 = vrot.slane %v1848, 1
        %v1961 = vrot.slane %v1849, 1
        %v1962 = vsel %vm542, %v1960, %v1961
        %v1963 = vrot.slane %v1850, 1
        %v1964 = vsel %vm542, %v1961, %v1963
        %v1965 = vrot.slane %v1851, 1
        %v1966 = vrot.slane %v1852, 1
        %v1967 = vsel %vm542, %v1965, %v1966
        %v1968 = vrot.slane %v1853, 1
        %v1969 = vsel %vm542, %v1966, %v1968
        %v1970 = vrot.slane %v1854, 1
        %v1971 = vrot.slane %v1855, 1
        %v1972 = vsel %vm542, %v1970, %v1971
        %v1973 = vrot.slane %v1856, 1
        %v1974 = vsel %vm542, %v1971, %v1973
        %v1975 = vrot.slane %v1857, 1
        %v1976 = vrot.slane %v1858, 1
        %v1977 = vsel %vm542, %v1975, %v1976
        %v1978 = vrot.slane %v1859, 1
        %v1979 = vsel %vm542, %v1976, %v1978
        %v1980 = vrot.slane %v1860, 1
        %v1981 = vrot.slane %v1861, 1
        %v1982 = vsel %vm542, %v1980, %v1981
        %v1983 = vrot.slane %v1862, 1
        %v1984 = vsel %vm542, %v1981, %v1983
        %v1985 = vrot.slane %v1863, 1
        %v1986 = vrot.slane %v1864, 1
        %v1987 = vsel %vm542, %v1985, %v1986
        %v1988 = vrot.slane %v1865, 1
        %v1989 = vsel %vm542, %v1986, %v1988
        %v1990 = vrot.slane %v1866, 1
        %v1991 = vrot.slane %v1867, 1
        %v1992 = vsel %vm542, %v1990, %v1991
        %v1993 = vrot.slane %v1868, 1
        %v1994 = vsel %vm542, %v1991, %v1993
        %v1995 = vrot.slane %v1869, 1
        %v1996 = vrot.slane %v1870, 1
        %v1997 = vsel %vm542, %v1995, %v1996
        %v1998 = vrot.slane %v1871, 1
        %v1999 = vsel %vm542, %v1996, %v1998
        %v2032 = vadd.f32 %v1755, %v1922
        %v2033 = vadd.f32 %v1756, %v1924
        %v2034 = vadd.f32 %v1757, %v1927
        %v2035 = vadd.f32 %v1758, %v1929
        %v2036 = vadd.f32 %v1759, %v1932
        %v2037 = vadd.f32 %v1760, %v1934
        %v2038 = vadd.f32 %v1761, %v1937
        %v2039 = vadd.f32 %v1762, %v1939
        %v2040 = vadd.f32 %v1763, %v1942
        %v2041 = vadd.f32 %v1764, %v1944
        %v2042 = vadd.f32 %v1765, %v1947
        %v2043 = vadd.f32 %v1766, %v1949
        %v2044 = vadd.f32 %v1767, %v1952
        %v2045 = vadd.f32 %v1768, %v1954
        %v2046 = vadd.f32 %v1769, %v1957
        %v2047 = vadd.f32 %v1770, %v1959
        %v2048 = vadd.f32 %v1771, %v1962
        %v2049 = vadd.f32 %v1772, %v1964
        %v2050 = vadd.f32 %v1773, %v1967
        %v2051 = vadd.f32 %v1774, %v1969
        %v2052 = vadd.f32 %v1775, %v1972
        %v2053 = vadd.f32 %v1776, %v1974
        %v2054 = vadd.f32 %v1777, %v1977
        %v2055 = vadd.f32 %v1778, %v1979
        %v2056 = vadd.f32 %v1779, %v1982
        %v2057 = vadd.f32 %v1780, %v1984
        %v2058 = vadd.f32 %v1781, %v1987
        %v2059 = vadd.f32 %v1782, %v1989
        %v2060 = vadd.f32 %v1783, %v1992
        %v2061 = vadd.f32 %v1784, %v1994
        %v2062 = vadd.f32 %v1785, %v1997
        %v2063 = vadd.f32 %v1786, %v1999
        %v2064 = vld [vmem:[%s1653] sm:$0xe]
        %v2065 = vld [vmem:[%s1653 + $0xc] sm:$0xe]
        %v2066 = vld [vmem:[%s1653 + $0x18] sm:$0xe]
        %v2067 = vld [vmem:[%s1653 + $0x24] sm:$0xe]
        %v2068 = vld [vmem:[%s1653 + $0x30] sm:$0xe]
        %v2069 = vld [vmem:[%s1653 + $0x3c] sm:$0xe]
        %v2070 = vld [vmem:[%s1653 + $0x48] sm:$0xe]
        %v2071 = vld [vmem:[%s1653 + $0x54] sm:$0xe]
        %v2072 = vld [vmem:[%s1653 + $0x60] sm:$0xe]
        %v2073 = vld [vmem:[%s1653 + $0x6c] sm:$0xe]
        %v2074 = vld [vmem:[%s1653 + $0x78] sm:$0xe]
        %v2075 = vld [vmem:[%s1653 + $0x84] sm:$0xe]
        %v2076 = vld [vmem:[%s1653 + $0x90] sm:$0xe]
        %v2077 = vld [vmem:[%s1653 + $0x9c] sm:$0xe]
        %v2078 = vld [vmem:[%s1653 + $0xa8] sm:$0xe]
        %v2079 = vld [vmem:[%s1653 + $0xb4] sm:$0xe]
        %v2080 = vunpack.c.l.bf16 %v2064
        %v2081 = vunpack.c.l.bf16 %v2065
        %v2082 = vunpack.c.l.bf16 %v2066
        %v2083 = vunpack.c.l.bf16 %v2067
        %v2084 = vunpack.c.l.bf16 %v2068
        %v2085 = vunpack.c.l.bf16 %v2069
        %v2086 = vunpack.c.l.bf16 %v2070
        %v2087 = vunpack.c.l.bf16 %v2071
        %v2088 = vunpack.c.l.bf16 %v2072
        %v2089 = vunpack.c.l.bf16 %v2073
        %v2090 = vunpack.c.l.bf16 %v2074
        %v2091 = vunpack.c.l.bf16 %v2075
        %v2092 = vunpack.c.l.bf16 %v2076
        %v2093 = vunpack.c.l.bf16 %v2077
        %v2094 = vunpack.c.l.bf16 %v2078
        %v2095 = vunpack.c.l.bf16 %v2079
        %v2096 = vld [vmem:[#allocation5 + $0x8] sm:$0x1]
        %v2097 = vlaneseq
        %v2098 = vshrl.u32 %v2097, 7
        %v2099 = vsub.s32 0, %v2098
        %v2100 = vrot.slane %v2096, %v2099
        %v2101 = vmul.f32 %v2080, %v2100
        %v2102 = vmul.f32 %v1687, %v2100
        %v2103 = vmul.f32 %v1803, %v2100
        %v2104 = vmul.f32 %v2081, %v2100
        %v2105 = vmul.f32 %v1689, %v2100
        %v2106 = vmul.f32 %v1804, %v2100
        %v2107 = vmul.f32 %v2082, %v2100
        %v2108 = vmul.f32 %v1691, %v2100
        %v2109 = vmul.f32 %v1805, %v2100
        %v2110 = vmul.f32 %v2083, %v2100
        %v2111 = vmul.f32 %v1693, %v2100
        %v2112 = vmul.f32 %v1806, %v2100
        %v2113 = vmul.f32 %v2084, %v2100
        %v2114 = vmul.f32 %v1695, %v2100
        %v2115 = vmul.f32 %v1807, %v2100
        %v2116 = vmul.f32 %v2085, %v2100
        %v2117 = vmul.f32 %v1697, %v2100
        %v2118 = vmul.f32 %v1808, %v2100
        %v2119 = vmul.f32 %v2086, %v2100
        %v2120 = vmul.f32 %v1699, %v2100
        %v2121 = vmul.f32 %v1809, %v2100
        %v2122 = vmul.f32 %v2087, %v2100
        %v2123 = vmul.f32 %v1701, %v2100
        %v2124 = vmul.f32 %v1810, %v2100
        %v2125 = vmul.f32 %v2088, %v2100
        %v2126 = vmul.f32 %v1703, %v2100
        %v2127 = vmul.f32 %v1811, %v2100
        %v2128 = vmul.f32 %v2089, %v2100
        %v2129 = vmul.f32 %v1705, %v2100
        %v2130 = vmul.f32 %v1812, %v2100
        %v2131 = vmul.f32 %v2090, %v2100
        %v2132 = vmul.f32 %v1707, %v2100
        %v2133 = vmul.f32 %v1813, %v2100
        %v2134 = vmul.f32 %v2091, %v2100
        %v2135 = vmul.f32 %v1709, %v2100
        %v2136 = vmul.f32 %v1814, %v2100
        %v2137 = vmul.f32 %v2092, %v2100
        %v2138 = vmul.f32 %v1711, %v2100
        %v2139 = vmul.f32 %v1815, %v2100
        %v2140 = vmul.f32 %v2093, %v2100
        %v2141 = vmul.f32 %v1713, %v2100
        %v2142 = vmul.f32 %v1816, %v2100
        %v2143 = vmul.f32 %v2094, %v2100
        %v2144 = vmul.f32 %v1715, %v2100
        %v2145 = vmul.f32 %v1817, %v2100
        %v2146 = vmul.f32 %v2095, %v2100
        %v2147 = vmul.f32 %v1717, %v2100
        %v2148 = vmul.f32 %v1818, %v2100
        %v2197 = vrot.slane %v2101, 2
        %v2198 = vrot.slane %v2102, 2
        %v2199 = vsel %vm820, %v2197, %v2198
        %v2200 = vrot.slane %v2103, 2
        %v2201 = vsel %vm820, %v2198, %v2200
        %v2202 = vrot.slane %v2104, 2
        %v2203 = vrot.slane %v2105, 2
        %v2204 = vsel %vm820, %v2202, %v2203
        %v2205 = vrot.slane %v2106, 2
        %v2206 = vsel %vm820, %v2203, %v2205
        %v2207 = vrot.slane %v2107, 2
        %v2208 = vrot.slane %v2108, 2
        %v2209 = vsel %vm820, %v2207, %v2208
        %v2210 = vrot.slane %v2109, 2
        %v2211 = vsel %vm820, %v2208, %v2210
        %v2212 = vrot.slane %v2110, 2
        %v2213 = vrot.slane %v2111, 2
        %v2214 = vsel %vm820, %v2212, %v2213
        %v2215 = vrot.slane %v2112, 2
        %v2216 = vsel %vm820, %v2213, %v2215
        %v2217 = vrot.slane %v2113, 2
        %v2218 = vrot.slane %v2114, 2
        %v2219 = vsel %vm820, %v2217, %v2218
        %v2220 = vrot.slane %v2115, 2
        %v2221 = vsel %vm820, %v2218, %v2220
        %v2222 = vrot.slane %v2116, 2
        %v2223 = vrot.slane %v2117, 2
        %v2224 = vsel %vm820, %v2222, %v2223
        %v2225 = vrot.slane %v2118, 2
        %v2226 = vsel %vm820, %v2223, %v2225
        %v2227 = vrot.slane %v2119, 2
        %v2228 = vrot.slane %v2120, 2
        %v2229 = vsel %vm820, %v2227, %v2228
        %v2230 = vrot.slane %v2121, 2
        %v2231 = vsel %vm820, %v2228, %v2230
        %v2232 = vrot.slane %v2122, 2
        %v2233 = vrot.slane %v2123, 2
        %v2234 = vsel %vm820, %v2232, %v2233
        %v2235 = vrot.slane %v2124, 2
        %v2236 = vsel %vm820, %v2233, %v2235
        %v2237 = vrot.slane %v2125, 2
        %v2238 = vrot.slane %v2126, 2
        %v2239 = vsel %vm820, %v2237, %v2238
        %v2240 = vrot.slane %v2127, 2
        %v2241 = vsel %vm820, %v2238, %v2240
        %v2242 = vrot.slane %v2128, 2
        %v2243 = vrot.slane %v2129, 2
        %v2244 = vsel %vm820, %v2242, %v2243
        %v2245 = vrot.slane %v2130, 2
        %v2246 = vsel %vm820, %v2243, %v2245
        %v2247 = vrot.slane %v2131, 2
        %v2248 = vrot.slane %v2132, 2
        %v2249 = vsel %vm820, %v2247, %v2248
        %v2250 = vrot.slane %v2133, 2
        %v2251 = vsel %vm820, %v2248, %v2250
        %v2252 = vrot.slane %v2134, 2
        %v2253 = vrot.slane %v2135, 2
        %v2254 = vsel %vm820, %v2252, %v2253
        %v2255 = vrot.slane %v2136, 2
        %v2256 = vsel %vm820, %v2253, %v2255
        %v2257 = vrot.slane %v2137, 2
        %v2258 = vrot.slane %v2138, 2
        %v2259 = vsel %vm820, %v2257, %v2258
        %v2260 = vrot.slane %v2139, 2
        %v2261 = vsel %vm820, %v2258, %v2260
        %v2262 = vrot.slane %v2140, 2
        %v2263 = vrot.slane %v2141, 2
        %v2264 = vsel %vm820, %v2262, %v2263
        %v2265 = vrot.slane %v2142, 2
        %v2266 = vsel %vm820, %v2263, %v2265
        %v2267 = vrot.slane %v2143, 2
        %v2268 = vrot.slane %v2144, 2
        %v2269 = vsel %vm820, %v2267, %v2268
        %v2270 = vrot.slane %v2145, 2
        %v2271 = vsel %vm820, %v2268, %v2270
        %v2272 = vrot.slane %v2146, 2
        %v2273 = vrot.slane %v2147, 2
        %v2274 = vsel %vm820, %v2272, %v2273
        %v2275 = vrot.slane %v2148, 2
        %v2276 = vsel %vm820, %v2273, %v2275
        %v2309 = vadd.f32 %v2032, %v2199
        %v2310 = vadd.f32 %v2033, %v2201
        %v2311 = vadd.f32 %v2034, %v2204
        %v2312 = vadd.f32 %v2035, %v2206
        %v2313 = vadd.f32 %v2036, %v2209
        %v2314 = vadd.f32 %v2037, %v2211
        %v2315 = vadd.f32 %v2038, %v2214
        %v2316 = vadd.f32 %v2039, %v2216
        %v2317 = vadd.f32 %v2040, %v2219
        %v2318 = vadd.f32 %v2041, %v2221
        %v2319 = vadd.f32 %v2042, %v2224
        %v2320 = vadd.f32 %v2043, %v2226
        %v2321 = vadd.f32 %v2044, %v2229
        %v2322 = vadd.f32 %v2045, %v2231
        %v2323 = vadd.f32 %v2046, %v2234
        %v2324 = vadd.f32 %v2047, %v2236
        %v2325 = vadd.f32 %v2048, %v2239
        %v2326 = vadd.f32 %v2049, %v2241
        %v2327 = vadd.f32 %v2050, %v2244
        %v2328 = vadd.f32 %v2051, %v2246
        %v2329 = vadd.f32 %v2052, %v2249
        %v2330 = vadd.f32 %v2053, %v2251
        %v2331 = vadd.f32 %v2054, %v2254
        %v2332 = vadd.f32 %v2055, %v2256
        %v2333 = vadd.f32 %v2056, %v2259
        %v2334 = vadd.f32 %v2057, %v2261
        %v2335 = vadd.f32 %v2058, %v2264
        %v2336 = vadd.f32 %v2059, %v2266
        %v2337 = vadd.f32 %v2060, %v2269
        %v2338 = vadd.f32 %v2061, %v2271
        %v2339 = vadd.f32 %v2062, %v2274
        %v2340 = vadd.f32 %v2063, %v2276
        %v2341 = vpack.c.bf16 %v2310, %v2309
        %v2342 = vpack.c.bf16 %v2312, %v2311
        %v2343 = vpack.c.bf16 %v2314, %v2313
        %v2344 = vpack.c.bf16 %v2316, %v2315
        %v2345 = vpack.c.bf16 %v2318, %v2317
        %v2346 = vpack.c.bf16 %v2320, %v2319
        %v2347 = vpack.c.bf16 %v2322, %v2321
        %v2348 = vpack.c.bf16 %v2324, %v2323
        %v2349 = vpack.c.bf16 %v2326, %v2325
        %v2350 = vpack.c.bf16 %v2328, %v2327
        %v2351 = vpack.c.bf16 %v2330, %v2329
        %v2352 = vpack.c.bf16 %v2332, %v2331
        %v2353 = vpack.c.bf16 %v2334, %v2333
        %v2354 = vpack.c.bf16 %v2336, %v2335
        %v2355 = vpack.c.bf16 %v2338, %v2337
        %v2356 = vpack.c.bf16 %v2340, %v2339
        %v2357 = vld [vmem:[#allocation7] sm:$0xf]
        %v2358 = vld [vmem:[#allocation7 + $0x4] sm:$0xf]
        %v2359 = vld [vmem:[#allocation7 + $0x8] sm:$0xf]
        %v2360 = vld [vmem:[#allocation7 + $0xc] sm:$0xf]
        %v2365 = vunpack.c.l.b16 %v2357
        %v2366 = vunpack.c.l.b16 %v2358
        %v2367 = vunpack.c.l.b16 %v2359
        %v2368 = vunpack.c.l.b16 %v2360
        %v2369 = vpack.c.b16 %v2366, %v2365
        %v2370 = vpack.c.b16 %v2368, %v2367
        %vm2373 = vcmask 261120
        %v2375 = vsel %vm2373, %v2341, 0
        %v2378 = vsel %vm2373, %v2342, 0
        %v2381 = vsel %vm2373, %v2343, 0
        %v2384 = vsel %vm2373, %v2344, 0
        %v2387 = vsel %vm2373, %v2345, 0
        %v2390 = vsel %vm2373, %v2346, 0
        %v2393 = vsel %vm2373, %v2347, 0
        %v2396 = vsel %vm2373, %v2348, 0
        %v2399 = vsel %vm2373, %v2349, 0
        %v2402 = vsel %vm2373, %v2350, 0
        %v2405 = vsel %vm2373, %v2351, 0
        %v2408 = vsel %vm2373, %v2352, 0
        %v2411 = vsel %vm2373, %v2353, 0
        %v2414 = vsel %vm2373, %v2354, 0
        %v2417 = vsel %vm2373, %v2355, 0
        %v2420 = vsel %vm2373, %v2356, 0
        %2422 = vmatprep.subr.bf16.mxu0 0
        %2423 = vmatpush1.bf16.msra.mxu0 %v2369
        %2424 = vmatprep.subr.bf16.mxu0 0
        %2425 = vmatpush1.bf16.msra.mxu0 %v2370
        %2426 = vmatprep.subr.bf16.mxu0 0
        %2427 = vmatpush1.bf16.msra.mxu0 0
        %2428 = vmatprep.subr.bf16.mxu0 0
        %2429 = vmatpush1.bf16.msra.mxu0 0
        %2430 = vmatprep.subr.bf16.mxu0 0
        %2431 = vmatpush1.bf16.msra.mxu0 0
        %2432 = vmatprep.subr.bf16.mxu0 0
        %2433 = vmatpush1.bf16.msra.mxu0 0
        %2434 = vmatprep.subr.bf16.mxu0 0
        %2435 = vmatpush1.bf16.msra.mxu0 0
        %2436 = vmatprep.subr.bf16.mxu0 0
        %2437 = vmatpush1.bf16.msra.mxu0 0
        %2438 = vmatprep.subr.bf16.mxu0 0
        %2439 = vmatpush1.bf16.msra.mxu0 0
        %2440 = vmatprep.subr.bf16.mxu0 0
        %2441 = vmatpush1.bf16.msra.mxu0 0
        %2442 = vmatprep.subr.bf16.mxu0 0
        %2443 = vmatpush1.bf16.msra.mxu0 0
        %2444 = vmatprep.subr.bf16.mxu0 0
        %2445 = vmatpush1.bf16.msra.mxu0 0
        %2446 = vmatprep.subr.bf16.mxu0 0
        %2447 = vmatpush1.bf16.msra.mxu0 0
        %2448 = vmatprep.subr.bf16.mxu0 0
        %2449 = vmatpush1.bf16.msra.mxu0 0
        %2450 = vmatprep.subr.bf16.mxu0 0
        %2451 = vmatpush1.bf16.msra.mxu0 0
        %2452 = vmatprep.subr.bf16.mxu0 0
        %2453 = vmatpush1.bf16.msra.mxu0 0
        %2454 = vmatprep.mubr.bf16.mxu0 0
        %2455 = vmatmul.mubr.bf16.gmra.mrb[0].mxu0 %v2375
        %v2456 = vpop.f32.mrb[0].mxu0
        %v2457 = vadd.f32 0.0, %v2456
        %v2458 = vpop.f32.mrb[0].mxu0
        %v2459 = vpop.f32.mrb[0].mxu0
        %v2460 = vadd.f32 0.0, %v2459
        %v2461 = vpop.f32.mrb[0].mxu0
        %2462 = vmatprep.mubr.bf16.mxu0 0
        %2463 = vmatmul.mubr.bf16.gmra.mrb[0].mxu0 %v2378
        %v2464 = vpop.f32.mrb[0].mxu0
        %v2465 = vadd.f32 0.0, %v2464
        %v2466 = vpop.f32.mrb[0].mxu0
        %v2467 = vpop.f32.mrb[0].mxu0
        %v2468 = vadd.f32 0.0, %v2467
        %v2469 = vpop.f32.mrb[0].mxu0
        %2470 = vmatprep.mubr.bf16.mxu0 0
        %2471 = vmatmul.mubr.bf16.gmra.mrb[0].mxu0 %v2381
        %v2472 = vpop.f32.mrb[0].mxu0
        %v2473 = vadd.f32 0.0, %v2472
        %v2474 = vpop.f32.mrb[0].mxu0
        %v2475 = vpop.f32.mrb[0].mxu0
        %v2476 = vadd.f32 0.0, %v2475
        %v2477 = vpop.f32.mrb[0].mxu0
        %2478 = vmatprep.mubr.bf16.mxu0 0
        %2479 = vmatmul.mubr.bf16.gmra.mrb[0].mxu0 %v2384
        %v2480 = vpop.f32.mrb[0].mxu0
        %v2481 = vadd.f32 0.0, %v2480
        %v2482 = vpop.f32.mrb[0].mxu0
        %v2483 = vpop.f32.mrb[0].mxu0
        %v2484 = vadd.f32 0.0, %v2483
        %v2485 = vpop.f32.mrb[0].mxu0
        %2486 = vmatprep.mubr.bf16.mxu0 0
        %2487 = vmatmul.mubr.bf16.gmra.mrb[0].mxu0 %v2387
        %v2488 = vpop.f32.mrb[0].mxu0
        %v2489 = vadd.f32 0.0, %v2488
        %v2490 = vpop.f32.mrb[0].mxu0
        %v2491 = vpop.f32.mrb[0].mxu0
        %v2492 = vadd.f32 0.0, %v2491
        %v2493 = vpop.f32.mrb[0].mxu0
        %2494 = vmatprep.mubr.bf16.mxu0 0
        %2495 = vmatmul.mubr.bf16.gmra.mrb[0].mxu0 %v2390
        %v2496 = vpop.f32.mrb[0].mxu0
        %v2497 = vadd.f32 0.0, %v2496
        %v2498 = vpop.f32.mrb[0].mxu0
        %v2499 = vpop.f32.mrb[0].mxu0
        %v2500 = vadd.f32 0.0, %v2499
        %v2501 = vpop.f32.mrb[0].mxu0
        %2502 = vmatprep.mubr.bf16.mxu0 0
        %2503 = vmatmul.mubr.bf16.gmra.mrb[0].mxu0 %v2393
        %v2504 = vpop.f32.mrb[0].mxu0
        %v2505 = vadd.f32 0.0, %v2504
        %v2506 = vpop.f32.mrb[0].mxu0
        %v2507 = vpop.f32.mrb[0].mxu0
        %v2508 = vadd.f32 0.0, %v2507
        %v2509 = vpop.f32.mrb[0].mxu0
        %2510 = vmatprep.mubr.bf16.mxu0 0
        %2511 = vmatmul.mubr.bf16.gmra.mrb[0].mxu0 %v2396
        %v2512 = vpop.f32.mrb[0].mxu0
        %v2513 = vadd.f32 0.0, %v2512
        %v2514 = vpop.f32.mrb[0].mxu0
        %v2515 = vpop.f32.mrb[0].mxu0
        %v2516 = vadd.f32 0.0, %v2515
        %v2517 = vpop.f32.mrb[0].mxu0
        %2518 = vmatprep.mubr.bf16.mxu0 0
        %2519 = vmatmul.mubr.bf16.gmra.mrb[0].mxu0 %v2399
        %v2520 = vpop.f32.mrb[0].mxu0
        %v2521 = vadd.f32 0.0, %v2520
        %v2522 = vpop.f32.mrb[0].mxu0
        %v2523 = vpop.f32.mrb[0].mxu0
        %v2524 = vadd.f32 0.0, %v2523
        %v2525 = vpop.f32.mrb[0].mxu0
        %2526 = vmatprep.mubr.bf16.mxu0 0
        %2527 = vmatmul.mubr.bf16.gmra.mrb[0].mxu0 %v2402
        %v2528 = vpop.f32.mrb[0].mxu0
        %v2529 = vadd.f32 0.0, %v2528
        %v2530 = vpop.f32.mrb[0].mxu0
        %v2531 = vpop.f32.mrb[0].mxu0
        %v2532 = vadd.f32 0.0, %v2531
        %v2533 = vpop.f32.mrb[0].mxu0
        %2534 = vmatprep.mubr.bf16.mxu0 0
        %2535 = vmatmul.mubr.bf16.gmra.mrb[0].mxu0 %v2405
        %v2536 = vpop.f32.mrb[0].mxu0
        %v2537 = vadd.f32 0.0, %v2536
        %v2538 = vpop.f32.mrb[0].mxu0
        %v2539 = vpop.f32.mrb[0].mxu0
        %v2540 = vadd.f32 0.0, %v2539
        %v2541 = vpop.f32.mrb[0].mxu0
        %2542 = vmatprep.mubr.bf16.mxu0 0
        %2543 = vmatmul.mubr.bf16.gmra.mrb[0].mxu0 %v2408
        %v2544 = vpop.f32.mrb[0].mxu0
        %v2545 = vadd.f32 0.0, %v2544
        %v2546 = vpop.f32.mrb[0].mxu0
        %v2547 = vpop.f32.mrb[0].mxu0
        %v2548 = vadd.f32 0.0, %v2547
        %v2549 = vpop.f32.mrb[0].mxu0
        %2550 = vmatprep.mubr.bf16.mxu0 0
        %2551 = vmatmul.mubr.bf16.gmra.mrb[0].mxu0 %v2411
        %v2552 = vpop.f32.mrb[0].mxu0
        %v2553 = vadd.f32 0.0, %v2552
        %v2554 = vpop.f32.mrb[0].mxu0
        %v2555 = vpop.f32.mrb[0].mxu0
        %v2556 = vadd.f32 0.0, %v2555
        %v2557 = vpop.f32.mrb[0].mxu0
        %2558 = vmatprep.mubr.bf16.mxu0 0
        %2559 = vmatmul.mubr.bf16.gmra.mrb[0].mxu0 %v2414
        %v2560 = vpop.f32.mrb[0].mxu0
        %v2561 = vadd.f32 0.0, %v2560
        %v2562 = vpop.f32.mrb[0].mxu0
        %v2563 = vpop.f32.mrb[0].mxu0
        %v2564 = vadd.f32 0.0, %v2563
        %v2565 = vpop.f32.mrb[0].mxu0
        %2566 = vmatprep.mubr.bf16.mxu0 0
        %2567 = vmatmul.mubr.bf16.gmra.mrb[0].mxu0 %v2417
        %v2568 = vpop.f32.mrb[0].mxu0
        %v2569 = vadd.f32 0.0, %v2568
        %v2570 = vpop.f32.mrb[0].mxu0
        %v2571 = vpop.f32.mrb[0].mxu0
        %v2572 = vadd.f32 0.0, %v2571
        %v2573 = vpop.f32.mrb[0].mxu0
        %2574 = vmatprep.mubr.bf16.mxu0 0
        %2575 = vmatmul.mubr.bf16.gmra.mrb[0].mxu0 %v2420
        %v2576 = vpop.f32.mrb[0].mxu0
        %v2577 = vadd.f32 0.0, %v2576
        %v2578 = vpop.f32.mrb[0].mxu0
        %v2579 = vpop.f32.mrb[0].mxu0
        %v2580 = vadd.f32 0.0, %v2579
        %v2581 = vpop.f32.mrb[0].mxu0
        %2582 = vdwg.mxu0
        %2583 = vst [vmem:[%s272] sm:$0xff] %v2457
        %2584 = vst [vmem:[%s272 + $0x8] sm:$0xff] %v2460
        %2585 = vst [vmem:[%s272 + $0x10] sm:$0xff] %v2465
        %2586 = vst [vmem:[%s272 + $0x18] sm:$0xff] %v2468
        %2587 = vst [vmem:[%s272 + $0x20] sm:$0xff] %v2473
        %2588 = vst [vmem:[%s272 + $0x28] sm:$0xff] %v2476
        %2589 = vst [vmem:[%s272 + $0x30] sm:$0xff] %v2481
        %2590 = vst [vmem:[%s272 + $0x38] sm:$0xff] %v2484
        %2591 = vst [vmem:[%s272 + $0x40] sm:$0xff] %v2489
        %2592 = vst [vmem:[%s272 + $0x48] sm:$0xff] %v2492
        %2593 = vst [vmem:[%s272 + $0x50] sm:$0xff] %v2497
        %2594 = vst [vmem:[%s272 + $0x58] sm:$0xff] %v2500
        %2595 = vst [vmem:[%s272 + $0x60] sm:$0xff] %v2505
        %2596 = vst [vmem:[%s272 + $0x68] sm:$0xff] %v2508
        %2597 = vst [vmem:[%s272 + $0x70] sm:$0xff] %v2513
        %2598 = vst [vmem:[%s272 + $0x78] sm:$0xff] %v2516
        %2599 = vst [vmem:[%s272 + $0x80] sm:$0xff] %v2521
        %2600 = vst [vmem:[%s272 + $0x88] sm:$0xff] %v2524
        %2601 = vst [vmem:[%s272 + $0x90] sm:$0xff] %v2529
        %2602 = vst [vmem:[%s272 + $0x98] sm:$0xff] %v2532
        %2603 = vst [vmem:[%s272 + $0xa0] sm:$0xff] %v2537
        %2604 = vst [vmem:[%s272 + $0xa8] sm:$0xff] %v2540
        %2605 = vst [vmem:[%s272 + $0xb0] sm:$0xff] %v2545
        %2606 = vst [vmem:[%s272 + $0xb8] sm:$0xff] %v2548
        %2607 = vst [vmem:[%s272 + $0xc0] sm:$0xff] %v2553
        %2608 = vst [vmem:[%s272 + $0xc8] sm:$0xff] %v2556
        %2609 = vst [vmem:[%s272 + $0xd0] sm:$0xff] %v2561
        %2610 = vst [vmem:[%s272 + $0xd8] sm:$0xff] %v2564
        %2611 = vst [vmem:[%s272 + $0xe0] sm:$0xff] %v2569
        %2612 = vst [vmem:[%s272 + $0xe8] sm:$0xff] %v2572
        %2613 = vst [vmem:[%s272 + $0xf0] sm:$0xff] %v2577
        %2614 = vst [vmem:[%s272 + $0xf8] sm:$0xff] %v2580
        %s2615 = sand.u32 %s143, 1
        %s2616 = scalar_lea.sflag [#allocation4], %s2615
        %s2617 = sand.u32 %s143, 1
        %s2618 = smul.addr %s2617, 256
        %s2619 = scalar_lea.vmem [#allocation8], %s2618
        // Predicated region
        $region45: #{separable_conv2d_same.1} parent=31 // pred_check
          %p2620 = pneg %p153
        $region46: #{separable_conv2d_same.1} parent=31 // pred_check_branch
          %2622 = sbr.rel (%p2620) target = $region48
        $region47: #{separable_conv2d_same.1} parent=31 // pred_region
          %s2623 = smul.u32 16, %s28
          %s2625 = ssub.s32 4096, 4096
          %2626 = vsyncadd %s2616, %s2625
          %s2627 = smul.addr %s2623, 2
          %s2628 = sadd.s32 %s29, %s2627
          %s2629 = smul.addr %s27, 32
          %s2630 = sadd.s32 %s2628, %s2629
          %s2631 = smul.addr %s2630, 128
          %s2632 = scalar_lea.hbm %s3, %s2631
          %s2633 = sshll.u32 %s2619, 4
          %s2634 = int_to_ptr.vmem [resolvable:$true] %s2633
          %2639 = dma.vmem_to_hbm [thread:$0]  %s2634, 4096, %s2632, %s2616, 128, 128, 8
        $region48: #{separable_conv2d_same.1} parent=31 // pred_fallthru
          _
      $region32: #{separable_conv2d_same.1} parent=5 // pred_fallthru
        _
      %p2640 = scmp.le.s32.totalorder 2, %s16
      // Predicated region
      $region49: #{separable_conv2d_same.1} parent=5 // pred_check
        %p2641 = pneg %p2640
      $region50: #{separable_conv2d_same.1} parent=5 // pred_check_branch
        %2643 = sbr.rel (%p2641) target = $region52
      $region51: #{separable_conv2d_same.1} parent=5 // pred_region
        %s2644 = ssub.s32 %s16, 2
        // Predicated region
        $region53: #{separable_conv2d_same.1} parent=51 // pred_check
          %p2645 = pneg %p159
        $region54: #{separable_conv2d_same.1} parent=51 // pred_check_branch
          %2647 = sbr.rel (%p2645) target = $region56
        $region55: #{separable_conv2d_same.1} parent=51 // pred_region
          %s2648 = sand.u32 %s144, 1
          %s2649 = scalar_lea.sflag [#allocation4], %s2648
          %s2650 = sand.u32 %s144, 1
          %s2651 = smul.addr %s2650, 256
          %s2652 = scalar_lea.vmem [#allocation8], %s2651
          %2653 = dma.done %s2649, 4096
        $region56: #{separable_conv2d_same.1} parent=51 // pred_fallthru
          _
      $region52: #{separable_conv2d_same.1} parent=5 // pred_fallthru
        _
    $region6: #{separable_conv2d_same.1} parent=1 // loop_footer
      %s20 = sadd.s32 1, %s16
    $region7: #{separable_conv2d_same.1} parent=1 // loop_footer_branch
      %15 = sbr.rel target = $region3
    $region8: #{separable_conv2d_same.1} parent=1 // loop_exit
      _
    %2654 = vsyncpa [#allocation3], 1
    %s2655 = scalar_lea.sflag [#allocation3], 1
    %2656 = vsyncpa %s2655, 1
    %2657 = vsyncpa [#allocation6], 1
    %2658 = vsyncpa [#allocation4], 1
    %s2659 = scalar_lea.sflag [#allocation4], 1
    %2660 = vsyncpa %s2659, 1

</llo_original>
